<compile_context>
chip_gen: v7x
topology: tpu7x:2x2x1
jax: 0.10.0
libtpu: 0.0.40
codegen_flags: <defaults>
</compile_context>

<pallas_src>
import jax
import jax.numpy as jnp
from jax.experimental import pallas as pl
from jax.experimental.pallas import tpu as pltpu


def fusion_kernel(x_ref, w1_ref, b1_ref, w4_ref, b4_ref, o_ref):
    """One H-slab: h = relu(x @ w1_slab + b1_slab); o += h @ w4_slab (+ b4 at end)."""
    j = pl.program_id(0)

    @pl.when(j == 0)
    def _():
        o_ref[...] = jnp.zeros_like(o_ref)

    # fc1 slab: (B, D_in) bf16 @ (D_in, Hb) bf16 -> f32 accumulation on MXU.
    h = jnp.dot(x_ref[...].astype(jnp.bfloat16), w1_ref[...],
                preferred_element_type=jnp.float32)
    h = jnp.maximum(h + b1_ref[...], 0.0)          # bias + ReLU
    # dropout -> identity (eval mode)

    # partial fc4: (B, Hb) bf16 @ (Hb, Np) bf16 -> f32, accumulated directly
    # into the resident f32 output block across H slabs.
    o_ref[...] += jnp.dot(h.astype(jnp.bfloat16), w4_ref[...],
                          preferred_element_type=jnp.float32)

    @pl.when(j == pl.num_programs(0) - 1)
    def _():
        o_ref[...] += b4_ref[...]


def prepare_params(w1, b1, w4, b4):
    """One-time weight prep: bf16 streaming weights, lane-padded fc4.

    w1: (D_in, H); b1: (1, H); w4: (H, C); b4: (1, C).
    Returns (w1_bf16, b1_f32, w4_padded_bf16, b4_padded_f32, C).
    """
    H, C = w4.shape
    n_pad = pl.cdiv(max(C, 128), 128) * 128
    w1_bf = w1.astype(jnp.bfloat16)
    b1_f = b1.astype(jnp.float32)
    w4_p = jnp.zeros((H, n_pad), jnp.bfloat16).at[:, :C].set(w4.astype(jnp.bfloat16))
    b4_p = jnp.zeros((1, n_pad), jnp.float32).at[:, :C].set(b4.astype(jnp.float32))
    return w1_bf, b1_f, w4_p, b4_p, C


def fusion_net_forward(x, w1_bf, b1_f, w4_p, b4_p, num_classes, *, block_h=512):
    """x: (B, D_in). Weights must come from prepare_params (bf16 / pre-padded)."""
    B, D_in = x.shape
    H = w1_bf.shape[1]
    n_pad = w4_p.shape[1]
    assert H % block_h == 0, "block_h must divide the hidden dim"
    n_h = H // block_h

    out_padded = pl.pallas_call(
        fusion_kernel,
        out_shape=jax.ShapeDtypeStruct((B, n_pad), jnp.float32),
        grid=(n_h,),
        in_specs=[
            pl.BlockSpec((B, D_in), lambda j: (0, 0)),         # x (resident)
            pl.BlockSpec((D_in, block_h), lambda j: (0, j)),   # w1 slab (pipelined)
            pl.BlockSpec((1, block_h), lambda j: (0, j)),      # b1 slab
            pl.BlockSpec((block_h, n_pad), lambda j: (j, 0)),  # w4 slab (bf16)
            pl.BlockSpec((1, n_pad), lambda j: (0, 0)),        # b4 (resident)
        ],
        # Resident f32 output block doubles as the accumulator across H slabs.
        out_specs=pl.BlockSpec((B, n_pad), lambda j: (0, 0)),
        compiler_params=pltpu.CompilerParams(
            # H is a reduction axis into a single resident output block.
            dimension_semantics=("arbitrary",),
            vmem_limit_bytes=16 * 1024 * 1024,
        ),
    )(x, w1_bf, b1_f, w4_p, b4_p)

    return out_padded[:, :num_classes].astype(x.dtype)


def init_params(key, input_size=1536, hidden=1024, num_classes=3, dtype=jnp.float32):
    """Deterministic PyTorch-style (Kaiming-uniform-ish) init of the two Linears."""
    k1, k2, k3, k4 = jax.random.split(key, 4)
    bound1 = 1.0 / (input_size ** 0.5)
    bound4 = 1.0 / (hidden ** 0.5)
    w1 = jax.random.uniform(k1, (input_size, hidden), dtype, -bound1, bound1)
    b1 = jax.random.uniform(k2, (1, hidden), dtype, -bound1, bound1)
    w4 = jax.random.uniform(k3, (hidden, num_classes), dtype, -bound4, bound4)
    b4 = jax.random.uniform(k4, (1, num_classes), dtype, -bound4, bound4)
    return w1, b1, w4, b4


if __name__ == "__main__":
    key = jax.random.PRNGKey(0)
    kx, kp = jax.random.split(key)

    # Shapes fixed by the module (fc1: 1536->1024, fc4: 1024->3); small batch.
    B, D_IN, H, C = 8, 1536, 1024, 3
    x = jax.random.normal(kx, (B, D_IN), jnp.float32)
    w1, b1, w4, b4 = init_params(kp, D_IN, H, C)

    # One-time parameter prep (hoisted out of the forward path).
    w1_bf, b1_f, w4_p, b4_p, nc = prepare_params(w1, b1, w4, b4)
    (w1_bf, b1_f, w4_p, b4_p) = jax.block_until_ready((w1_bf, b1_f, w4_p, b4_p))

    out = fusion_net_forward(x, w1_bf, b1_f, w4_p, b4_p, nc)
    out = jax.block_until_ready(out)

    # Pure-JAX reference with the same bf16 MXU inputs / f32 accumulation
    # (fc1 -> relu -> fc4, dropout = identity in eval mode).
    h_ref = jnp.maximum(
        jnp.dot(x.astype(jnp.bfloat16), w1.astype(jnp.bfloat16),
                preferred_element_type=jnp.float32) + b1, 0.0)
    ref = jnp.dot(h_ref.astype(jnp.bfloat16), w4.astype(jnp.bfloat16),
                  preferred_element_type=jnp.float32) + b4

    assert out.shape == (B, C)
    assert jnp.allclose(out, ref, atol=2e-3, rtol=2e-3)

    print("KERNEL_OK")
</pallas_src>

<mosaic_0001>
module attributes {stable_mosaic.version = 11 : i64} {
  func.func @fusion_kernel(%arg0: i32, %arg1: memref<8x1536xf32, #tpu.memory_space<vmem>>, %arg2: memref<1536x512xbf16, #tpu.memory_space<vmem>>, %arg3: memref<1x512xf32, #tpu.memory_space<vmem>>, %arg4: memref<512x128xbf16, #tpu.memory_space<vmem>>, %arg5: memref<1x128xf32, #tpu.memory_space<vmem>>, %arg6: memref<8x128xf32, #tpu.memory_space<vmem>>) attributes {dimension_semantics = [#tpu.dimension_semantics<arbitrary>], iteration_bounds = array<i64: 2>, scalar_prefetch = 0 : i64, scratch_operands = 0 : i64, tpu.core_type = #tpu.core_type<tc>, window_params = [{pipeline_mode = #tpu.pipeline_mode<synchronous>, transform_indices = @transform_0, window_bounds = array<i64: 8, 1536>}, {transform_indices = @transform_1, window_bounds = array<i64: 1536, 512>}, {transform_indices = @transform_2, window_bounds = array<i64: 1, 512>}, {transform_indices = @transform_3, window_bounds = array<i64: 512, 128>}, {pipeline_mode = #tpu.pipeline_mode<synchronous>, transform_indices = @transform_4, window_bounds = array<i64: 1, 128>}, {pipeline_mode = #tpu.pipeline_mode<synchronous>, transform_indices = @transform_5, window_bounds = array<i64: 8, 128>}]} {
    %c0_i32 = arith.constant 0 : i32
    %0 = arith.cmpi eq, %arg0, %c0_i32 : i32
    %1 = arith.extui %0 : i1 to i32
    %c0_i32_0 = arith.constant 0 : i32
    %2 = arith.cmpi ne, %1, %c0_i32_0 : i32
    scf.if %2 {
      %cst_15 = arith.constant 0.000000e+00 : f32
      %21 = vector.broadcast %cst_15 : f32 to vector<8x128xf32>
      %c0_16 = arith.constant 0 : index
      %c0_17 = arith.constant 0 : index
      %22 = vector.load %arg6[%c0_16, %c0_17] : memref<8x128xf32, #tpu.memory_space<vmem>>, vector<8x128xf32>
      tpu.vector_store %arg6[%c0_16, %c0_17], %21 {strides = array<i32>} : memref<8x128xf32, #tpu.memory_space<vmem>>, vector<8x128xf32>,
    } else {
    }
    %c0 = arith.constant 0 : index
    %c0_1 = arith.constant 0 : index
    %3 = vector.load %arg1[%c0, %c0_1] : memref<8x1536xf32, #tpu.memory_space<vmem>>, vector<8x1536xf32>
    %4 = arith.truncf %3 : vector<8x1536xf32> to vector<8x1536xbf16>
    %c0_2 = arith.constant 0 : index
    %c0_3 = arith.constant 0 : index
    %5 = vector.load %arg2[%c0_2, %c0_3] : memref<1536x512xbf16, #tpu.memory_space<vmem>>, vector<1536x512xbf16>
    %cst = arith.constant dense<0.000000e+00> : vector<8x512xf32>
    %6 = tpu.matmul %4, %5, %cst {dimension_numbers = #tpu.dot_dimension_numbers<[1], [0], [0], [1], [0, 0, 1, 1], [], []>} : vector<8x1536xbf16>, vector<1536x512xbf16>, vector<8x512xf32> -> vector<8x512xf32>
    %c0_4 = arith.constant 0 : index
    %c0_5 = arith.constant 0 : index
    %7 = vector.load %arg3[%c0_4, %c0_5] : memref<1x512xf32, #tpu.memory_space<vmem>>, vector<1x512xf32>
    %8 = vector.broadcast %7 : vector<1x512xf32> to vector<8x512xf32>
    %9 = arith.addf %6, %8 : vector<8x512xf32>
    %cst_6 = arith.constant 0.000000e+00 : f32
    %10 = vector.broadcast %cst_6 : f32 to vector<8x512xf32>
    %11 = arith.maximumf %9, %10 : vector<8x512xf32>
    %c0_7 = arith.constant 0 : index
    %c0_8 = arith.constant 0 : index
    %12 = vector.load %arg6[%c0_7, %c0_8] : memref<8x128xf32, #tpu.memory_space<vmem>>, vector<8x128xf32>
    %13 = arith.truncf %11 : vector<8x512xf32> to vector<8x512xbf16>
    %c0_9 = arith.constant 0 : index
    %c0_10 = arith.constant 0 : index
    %14 = vector.load %arg4[%c0_9, %c0_10] : memref<512x128xbf16, #tpu.memory_space<vmem>>, vector<512x128xbf16>
    %cst_11 = arith.constant dense<0.000000e+00> : vector<8x128xf32>
    %15 = tpu.matmul %13, %14, %cst_11 {dimension_numbers = #tpu.dot_dimension_numbers<[1], [0], [0], [1], [0, 0, 1, 1], [], []>} : vector<8x512xbf16>, vector<512x128xbf16>, vector<8x128xf32> -> vector<8x128xf32>
    %16 = arith.addf %12, %15 : vector<8x128xf32>
    %c0_12 = arith.constant 0 : index
    %c0_13 = arith.constant 0 : index
    %17 = vector.load %arg6[%c0_12, %c0_13] : memref<8x128xf32, #tpu.memory_space<vmem>>, vector<8x128xf32>
    tpu.vector_store %arg6[%c0_12, %c0_13], %16 {strides = array<i32>} : memref<8x128xf32, #tpu.memory_space<vmem>>, vector<8x128xf32>,
    %c1_i32 = arith.constant 1 : i32
    %18 = arith.cmpi eq, %arg0, %c1_i32 : i32
    %19 = arith.extui %18 : i1 to i32
    %c0_i32_14 = arith.constant 0 : i32
    %20 = arith.cmpi ne, %19, %c0_i32_14 : i32
    scf.if %20 {
      %c0_15 = arith.constant 0 : index
      %c0_16 = arith.constant 0 : index
      %21 = vector.load %arg6[%c0_15, %c0_16] : memref<8x128xf32, #tpu.memory_space<vmem>>, vector<8x128xf32>
      %c0_17 = arith.constant 0 : index
      %c0_18 = arith.constant 0 : index
      %22 = vector.load %arg5[%c0_17, %c0_18] : memref<1x128xf32, #tpu.memory_space<vmem>>, vector<1x128xf32>
      %23 = vector.broadcast %22 : vector<1x128xf32> to vector<8x128xf32>
      %24 = arith.addf %21, %23 : vector<8x128xf32>
      %c0_19 = arith.constant 0 : index
      %c0_20 = arith.constant 0 : index
      %25 = vector.load %arg6[%c0_19, %c0_20] : memref<8x128xf32, #tpu.memory_space<vmem>>, vector<8x128xf32>
      tpu.vector_store %arg6[%c0_19, %c0_20], %24 {strides = array<i32>} : memref<8x128xf32, #tpu.memory_space<vmem>>, vector<8x128xf32>,
    } else {
    }
    return
  }
  func.func @transform_0(%arg0: i32) -> (i32, i32) {
    %c0_i32 = arith.constant 0 : i32
    %c0_i32_0 = arith.constant 0 : i32
    %c0_i32_1 = arith.constant 0 : i32
    return %c0_i32, %c0_i32_0 : i32, i32
  }
  func.func @transform_1(%arg0: i32) -> (i32, i32) {
    %c0_i32 = arith.constant 0 : i32
    %c0_i32_0 = arith.constant 0 : i32
    return %c0_i32, %arg0 : i32, i32
  }
  func.func @transform_2(%arg0: i32) -> (i32, i32) {
    %c0_i32 = arith.constant 0 : i32
    %c0_i32_0 = arith.constant 0 : i32
    return %c0_i32, %arg0 : i32, i32
  }
  func.func @transform_3(%arg0: i32) -> (i32, i32) {
    %c0_i32 = arith.constant 0 : i32
    %c0_i32_0 = arith.constant 0 : i32
    return %arg0, %c0_i32 : i32, i32
  }
  func.func @transform_4(%arg0: i32) -> (i32, i32) {
    %c0_i32 = arith.constant 0 : i32
    %c0_i32_0 = arith.constant 0 : i32
    %c0_i32_1 = arith.constant 0 : i32
    return %c0_i32, %c0_i32_0 : i32, i32
  }
  func.func @transform_5(%arg0: i32) -> (i32, i32) {
    %c0_i32 = arith.constant 0 : i32
    %c0_i32_0 = arith.constant 0 : i32
    %c0_i32_1 = arith.constant 0 : i32
    return %c0_i32, %c0_i32_0 : i32, i32
  }
}

</mosaic_0001>

<llo_original>
// kernel: tpu_custom_call.1
$region0: #{tpu_custom_call.1}
  #allocation0 [shape = 'u32[]', space=smem, size = 0x4, offset = 0x4, fixed_abs, tag = 'smem constant byte address 0x4 - core index']
  #allocation1 [shape = 'u32[144,128]{1,0:T(1,128)}', space=vmem, size = 0x12000, scoped, tag = 'internal scratch']
  %s0 = inlined_call_operand.hbm [shape: f32[8,1536], index: 0, kind: input, shape index: {}]
  %s1 = inlined_call_operand.hbm [shape: bf16[1536,1024], index: 1, kind: input, shape index: {}]
  %s2 = inlined_call_operand.hbm [shape: f32[1,1024], index: 2, kind: input, shape index: {}]
  %s3 = inlined_call_operand.hbm [shape: bf16[1024,128], index: 3, kind: input, shape index: {}]
  %s4 = inlined_call_operand.hbm [shape: f32[1,128], index: 4, kind: input, shape index: {}]
  %s5 = inlined_call_operand.hbm [shape: f32[8,128], index: 5, kind: output, shape index: {}]
  %s6 = sld [smem:[#allocation0]]
  $region81: #{tpu_custom_call.1} parent=0
    _
  %s8 = ssub.s32 1, %s6
  %s9 = scalar_select 0, %s8, %s6
  $region1: #{tpu_custom_call.1} parent=0
    #allocation2 [shape = 'u8[49152]{0}', space=vmem, size = 0xc000, scoped, tag = 'input window, operand 0, single buffered']
    #allocation3 [shape = 's32[2]{0}', space=sflag, size = 0x8, scoped, tag = 'scoped memory for tpu_custom_call.1']
    #allocation4 [shape = 's32[2]{0}', space=sflag, size = 0x8, scoped, tag = 'scoped memory for tpu_custom_call.1']
    #allocation5 [shape = 'u8[3145728]{0}', space=vmem, size = 0x300000, scoped, tag = 'input window, operand 1']
    #allocation6 [shape = 's32[2]{0}', space=sflag, size = 0x8, scoped, tag = 'scoped memory for tpu_custom_call.1']
    #allocation7 [shape = 'u8[4096]{0}', space=vmem, size = 0x1000, scoped, tag = 'input window, operand 2']
    #allocation8 [shape = 'u8[262144]{0}', space=vmem, size = 0x40000, scoped, tag = 'input window, operand 3']
    #allocation9 [shape = 's32[2]{0}', space=sflag, size = 0x8, scoped, tag = 'scoped memory for tpu_custom_call.1']
    #allocation10 [shape = 'u8[512]{0}', space=vmem, size = 0x400, scoped, tag = 'input window, operand 4, single buffered']
    #allocation11 [shape = 'u8[4096]{0}', space=vmem, size = 0x1000, scoped, tag = 'output window, operand 0, single buffered']
    %10 = vsyncpa [#allocation3], 0
    %11 = vsyncpa [#allocation6], 0
    %s12 = scalar_lea.sflag [#allocation6], 1
    %13 = vsyncpa %s12, 0
    %14 = vsyncpa [#allocation9], 0
    %s15 = scalar_lea.sflag [#allocation9], 1
    %16 = vsyncpa %s15, 0
    %17 = vsyncpa [#allocation4], 0
    loop: start=0, step=1, limit=4
    $region2: #{tpu_custom_call.1} parent=1 // loop_pre_header
      _
    $region3: #{tpu_custom_call.1} parent=1 // loop_header
      %s19 = sphi 0, %s23
      %p20 = scmp.ge.s32.totalorder %s19, 4
      %s27 = sphi 0, %s27
      %s29 = sphi 0, %s27
      %s30 = sphi 0, %s29
      %s44 = sphi 0, %s30
      %s50 = sphi 0, %s52
      %s53 = sphi 0, %s50
      %s54 = sphi 0, %s53
      %s70 = sphi 0, %s54
      %s76 = sphi 0, %s78
      %s79 = sphi 0, %s76
      %s80 = sphi 0, %s79
      %s96 = sphi 0, %s80
      %s102 = sphi 0, %s104
      %s105 = sphi 0, %s102
      %s106 = sphi 0, %s105
      %s122 = sphi 0, %s106
      %s126 = sphi 0, %s126
      %s128 = sphi 0, %s126
      %s129 = sphi 0, %s128
      %s143 = sphi 0, %s129
      %s147 = sphi 0, %s147
      %s149 = sphi 0, %s147
      %s150 = sphi 0, %s149
      %s164 = sphi 0, %s150
    $region4: #{tpu_custom_call.1} parent=1 // loop_header_branch
      %22 = sbr.rel (%p20) target = $region8
    $region5: #{tpu_custom_call.1} parent=1 // loop_body
      %s24 = ssub.s32 %s19, 1
      %s25 = ssub.s32 %s19, 2
      %s26 = sadd.s32 %s19, 1
      %s28 = sadd.s32 %s27, 1
      %p31 = scmp.eq.s32.totalorder %s19, 1
      %p32 = scmp.ne.s32.totalorder %s27, %s29
      %p33 = scmp.eq.s32.totalorder %s19, 0
      %p34 = por %p32, %p33
      %p35 = scmp.ne.s32.totalorder %s27, %s29
      %p36 = scmp.eq.s32.totalorder %s24, 1
      %p37 = por %p35, %p36
      %p38 = scmp.ne.s32.totalorder %s29, %s30
      %p39 = scmp.eq.s32.totalorder %s24, 0
      %p40 = por %p38, %p39
      %p41 = scmp.ne.s32.totalorder %s29, %s30
      %p42 = scmp.eq.s32.totalorder %s25, 1
      %p43 = por %p41, %p42
      %p45 = scmp.ne.s32.totalorder %s30, %s44
      %p46 = scmp.eq.s32.totalorder %s25, 0
      %p47 = por %p45, %p46
      %s48 = ssub.s32 %s19, %s26
      %p49 = scmp.eq.s32.totalorder %s48, 0
      %s51 = sadd.s32 %s50, 1
      %s52 = scalar_select %p49, %s50, %s51
      %p55 = pneg %p49
      %p56 = scmp.eq.s32.totalorder %s19, 1
      %p57 = por %p55, %p56
      %p58 = scmp.ne.s32.totalorder %s50, %s53
      %p59 = scmp.eq.s32.totalorder %s19, 0
      %p60 = por %p58, %p59
      %p61 = scmp.ne.s32.totalorder %s50, %s53
      %p62 = scmp.eq.s32.totalorder %s24, 1
      %p63 = por %p61, %p62
      %p64 = scmp.ne.s32.totalorder %s53, %s54
      %p65 = scmp.eq.s32.totalorder %s24, 0
      %p66 = por %p64, %p65
      %p67 = scmp.ne.s32.totalorder %s53, %s54
      %p68 = scmp.eq.s32.totalorder %s25, 1
      %p69 = por %p67, %p68
      %p71 = scmp.ne.s32.totalorder %s54, %s70
      %p72 = scmp.eq.s32.totalorder %s25, 0
      %p73 = por %p71, %p72
      %s74 = ssub.s32 %s19, %s26
      %p75 = scmp.eq.s32.totalorder %s74, 0
      %s77 = sadd.s32 %s76, 1
      %s78 = scalar_select %p75, %s76, %s77
      %p81 = pneg %p75
      %p82 = scmp.eq.s32.totalorder %s19, 1
      %p83 = por %p81, %p82
      %p84 = scmp.ne.s32.totalorder %s76, %s79
      %p85 = scmp.eq.s32.totalorder %s19, 0
      %p86 = por %p84, %p85
      %p87 = scmp.ne.s32.totalorder %s76, %s79
      %p88 = scmp.eq.s32.totalorder %s24, 1
      %p89 = por %p87, %p88
      %p90 = scmp.ne.s32.totalorder %s79, %s80
      %p91 = scmp.eq.s32.totalorder %s24, 0
      %p92 = por %p90, %p91
      %p93 = scmp.ne.s32.totalorder %s79, %s80
      %p94 = scmp.eq.s32.totalorder %s25, 1
      %p95 = por %p93, %p94
      %p97 = scmp.ne.s32.totalorder %s80, %s96
      %p98 = scmp.eq.s32.totalorder %s25, 0
      %p99 = por %p97, %p98
      %s100 = ssub.s32 %s19, %s26
      %p101 = scmp.eq.s32.totalorder %s100, 0
      %s103 = sadd.s32 %s102, 1
      %s104 = scalar_select %p101, %s102, %s103
      %p107 = pneg %p101
      %p108 = scmp.eq.s32.totalorder %s19, 1
      %p109 = por %p107, %p108
      %p110 = scmp.ne.s32.totalorder %s102, %s105
      %p111 = scmp.eq.s32.totalorder %s19, 0
      %p112 = por %p110, %p111
      %p113 = scmp.ne.s32.totalorder %s102, %s105
      %p114 = scmp.eq.s32.totalorder %s24, 1
      %p115 = por %p113, %p114
      %p116 = scmp.ne.s32.totalorder %s105, %s106
      %p117 = scmp.eq.s32.totalorder %s24, 0
      %p118 = por %p116, %p117
      %p119 = scmp.ne.s32.totalorder %s105, %s106
      %p120 = scmp.eq.s32.totalorder %s25, 1
      %p121 = por %p119, %p120
      %p123 = scmp.ne.s32.totalorder %s106, %s122
      %p124 = scmp.eq.s32.totalorder %s25, 0
      %p125 = por %p123, %p124
      %s127 = sadd.s32 %s126, 1
      %p130 = scmp.eq.s32.totalorder %s19, 1
      %p131 = scmp.ne.s32.totalorder %s126, %s128
      %p132 = scmp.eq.s32.totalorder %s19, 0
      %p133 = por %p131, %p132
      %p134 = scmp.ne.s32.totalorder %s126, %s128
      %p135 = scmp.eq.s32.totalorder %s24, 1
      %p136 = por %p134, %p135
      %p137 = scmp.ne.s32.totalorder %s128, %s129
      %p138 = scmp.eq.s32.totalorder %s24, 0
      %p139 = por %p137, %p138
      %p140 = scmp.ne.s32.totalorder %s128, %s129
      %p141 = scmp.eq.s32.totalorder %s25, 1
      %p142 = por %p140, %p141
      %p144 = scmp.ne.s32.totalorder %s129, %s143
      %p145 = scmp.eq.s32.totalorder %s25, 0
      %p146 = por %p144, %p145
      %s148 = sadd.s32 %s147, 1
      %p151 = scmp.eq.s32.totalorder %s19, 1
      %p152 = scmp.ne.s32.totalorder %s147, %s149
      %p153 = scmp.eq.s32.totalorder %s19, 0
      %p154 = por %p152, %p153
      %p155 = scmp.ne.s32.totalorder %s147, %s149
      %p156 = scmp.eq.s32.totalorder %s24, 1
      %p157 = por %p155, %p156
      %p158 = scmp.ne.s32.totalorder %s149, %s150
      %p159 = scmp.eq.s32.totalorder %s24, 0
      %p160 = por %p158, %p159
      %p161 = scmp.ne.s32.totalorder %s149, %s150
      %p162 = scmp.eq.s32.totalorder %s25, 1
      %p163 = por %p161, %p162
      %p165 = scmp.ne.s32.totalorder %s150, %s164
      %p166 = scmp.eq.s32.totalorder %s25, 0
      %p167 = por %p165, %p166
      %p168 = scmp.le.s32.totalorder 1, %s19
      %p169 = scmp.lt.s32.totalorder %s19, 3
      %p170 = pnand %p168, %p169
      %p171 = pneg %p170
      // Predicated region
      $region9: #{tpu_custom_call.1} parent=5 // pred_check
        _
      $region10: #{tpu_custom_call.1} parent=5 // pred_check_branch
        %173 = sbr.rel (%p170) target = $region12
      $region11: #{tpu_custom_call.1} parent=5 // pred_region
        %s174 = ssub.s32 %s19, 1
        // Predicated region
        $region13: #{tpu_custom_call.1} parent=11 // pred_check
          %p175 = pneg %p40
        $region14: #{tpu_custom_call.1} parent=11 // pred_check_branch
          %177 = sbr.rel (%p175) target = $region16
        $region15: #{tpu_custom_call.1} parent=11 // pred_region
          %s179 = ssub.s32 1536, 1536
          %180 = vsyncadd [#allocation3], %s179
          %s182 = sshll.u32 [#allocation2], 4
          %s183 = int_to_ptr.vmem [resolvable:$true] %s182
          %185 = dma.hbm_to_vmem [thread:$0]  %s0, 1536, %s183, [#allocation3]
        $region16: #{tpu_custom_call.1} parent=11 // pred_fallthru
          _
        // Predicated region
        $region17: #{tpu_custom_call.1} parent=11 // pred_check
          %p186 = pneg %p139
        $region18: #{tpu_custom_call.1} parent=11 // pred_check_branch
          %188 = sbr.rel (%p186) target = $region20
        $region19: #{tpu_custom_call.1} parent=11 // pred_region
          %s190 = ssub.s32 16, 16
          %191 = vsyncadd [#allocation9], %s190
          %s193 = sshll.u32 [#allocation10], 4
          %s194 = int_to_ptr.vmem [resolvable:$true] %s193
          %196 = dma.hbm_to_vmem [thread:$0]  %s4, 16, %s194, [#allocation9]
        $region20: #{tpu_custom_call.1} parent=11 // pred_fallthru
          _
      $region12: #{tpu_custom_call.1} parent=5 // pred_fallthru
        _
      %p197 = scmp.lt.s32.totalorder %s19, 2
      // Predicated region
      $region21: #{tpu_custom_call.1} parent=5 // pred_check
        %p198 = pneg %p197
      $region22: #{tpu_custom_call.1} parent=5 // pred_check_branch
        %200 = sbr.rel (%p198) target = $region24
      $region23: #{tpu_custom_call.1} parent=5 // pred_region
        // Predicated region
        $region25: #{tpu_custom_call.1} parent=23 // pred_check
          %p201 = pneg %p60
        $region26: #{tpu_custom_call.1} parent=23 // pred_check_branch
          %203 = sbr.rel (%p201) target = $region28
        $region27: #{tpu_custom_call.1} parent=23 // pred_region
          %s204 = sand.u32 %s19, 1
          %s205 = scalar_lea.sflag [#allocation6], %s204
          %s206 = sand.u32 %s50, 1
          %s207 = smul.addr %s206, 3072
          %s208 = scalar_lea.vmem [#allocation5], %s207
          %s209 = smul.u32 4, %s19
          %s211 = ssub.s32 49152, 49152
          %212 = vsyncadd %s205, %s211
          %s213 = smul.addr %s209, 64
          %s214 = scalar_lea.hbm %s1, %s213
          %s215 = sshll.u32 %s208, 4
          %s216 = int_to_ptr.vmem [resolvable:$true] %s215
          %221 = dma.hbm_to_vmem [thread:$0]  %s214, 49152, %s216, %s205, 512, 256, 16
        $region28: #{tpu_custom_call.1} parent=23 // pred_fallthru
          _
        // Predicated region
        $region29: #{tpu_custom_call.1} parent=23 // pred_check
          %p222 = pneg %p86
        $region30: #{tpu_custom_call.1} parent=23 // pred_check_branch
          %224 = sbr.rel (%p222) target = $region32
        $region31: #{tpu_custom_call.1} parent=23 // pred_region
          %s225 = sand.u32 %s19, 1
          %s226 = scalar_lea.sflag [#allocation6], %s225
          %s227 = sand.u32 %s76, 1
          %s228 = smul.addr %s227, 4
          %s229 = scalar_lea.vmem [#allocation7], %s228
          %s230 = smul.u32 4, %s19
          %s232 = ssub.s32 64, 64
          %233 = vsyncadd %s226, %s232
          %s234 = smul.addr %s230, 16
          %s235 = scalar_lea.hbm %s2, %s234
          %s237 = sshll.u32 %s229, 4
          %s238 = int_to_ptr.vmem [resolvable:$true] %s237
          %240 = dma.hbm_to_vmem [thread:$0]  %s235, 64, %s238, %s226
        $region32: #{tpu_custom_call.1} parent=23 // pred_fallthru
          _
        // Predicated region
        $region33: #{tpu_custom_call.1} parent=23 // pred_check
          %p241 = pneg %p112
        $region34: #{tpu_custom_call.1} parent=23 // pred_check_branch
          %243 = sbr.rel (%p241) target = $region36
        $region35: #{tpu_custom_call.1} parent=23 // pred_region
          %s244 = sand.u32 %s19, 1
          %s245 = scalar_lea.sflag [#allocation9], %s244
          %s246 = sand.u32 %s102, 1
          %s247 = smul.addr %s246, 256
          %s248 = scalar_lea.vmem [#allocation8], %s247
          %s249 = smul.u32 64, %s19
          %s251 = ssub.s32 4096, 4096
          %252 = vsyncadd %s245, %s251
          %s253 = smul.addr %s249, 64
          %s254 = scalar_lea.hbm %s3, %s253
          %s255 = sshll.u32 %s248, 4
          %s256 = int_to_ptr.vmem [resolvable:$true] %s255
          %261 = dma.hbm_to_vmem [thread:$0]  %s254, 4096, %s256, %s245, 64, 64, 4
        $region36: #{tpu_custom_call.1} parent=23 // pred_fallthru
          _
      $region24: #{tpu_custom_call.1} parent=5 // pred_fallthru
        _
      %p262 = scmp.le.s32.totalorder 1, %s19
      %p263 = scmp.lt.s32.totalorder %s19, 3
      %p264 = pnand %p262, %p263
      %p265 = pneg %p264
      // Predicated region
      $region37: #{tpu_custom_call.1} parent=5 // pred_check
        _
      $region38: #{tpu_custom_call.1} parent=5 // pred_check_branch
        %267 = sbr.rel (%p264) target = $region40
      $region39: #{tpu_custom_call.1} parent=5 // pred_region
        %s268 = ssub.s32 %s19, 1
        // Predicated region
        $region41: #{tpu_custom_call.1} parent=39 // pred_check
          %p269 = pneg %p40
        $region42: #{tpu_custom_call.1} parent=39 // pred_check_branch
          %271 = sbr.rel (%p269) target = $region44
        $region43: #{tpu_custom_call.1} parent=39 // pred_region
          %272 = dma.done [#allocation3], 1536
        $region44: #{tpu_custom_call.1} parent=39 // pred_fallthru
          _
        %s273 = sand.u32 %s24, 1
        %s274 = scalar_lea.sflag [#allocation6], %s273
        %s275 = sand.u32 %s53, 1
        %s276 = smul.addr %s275, 3072
        %s277 = scalar_lea.vmem [#allocation5], %s276
        // Predicated region
        $region45: #{tpu_custom_call.1} parent=39 // pred_check
          %p278 = pneg %p66
        $region46: #{tpu_custom_call.1} parent=39 // pred_check_branch
          %280 = sbr.rel (%p278) target = $region48
        $region47: #{tpu_custom_call.1} parent=39 // pred_region
          %281 = dma.done %s274, 49152
        $region48: #{tpu_custom_call.1} parent=39 // pred_fallthru
          _
        %s282 = sand.u32 %s24, 1
        %s283 = scalar_lea.sflag [#allocation6], %s282
        %s284 = sand.u32 %s79, 1
        %s285 = smul.addr %s284, 4
        %s286 = scalar_lea.vmem [#allocation7], %s285
        // Predicated region
        $region49: #{tpu_custom_call.1} parent=39 // pred_check
          %p287 = pneg %p92
        $region50: #{tpu_custom_call.1} parent=39 // pred_check_branch
          %289 = sbr.rel (%p287) target = $region52
        $region51: #{tpu_custom_call.1} parent=39 // pred_region
          %290 = dma.done %s283, 64
        $region52: #{tpu_custom_call.1} parent=39 // pred_fallthru
          _
        %s291 = sand.u32 %s24, 1
        %s292 = scalar_lea.sflag [#allocation9], %s291
        %s293 = sand.u32 %s105, 1
        %s294 = smul.addr %s293, 256
        %s295 = scalar_lea.vmem [#allocation8], %s294
        // Predicated region
        $region53: #{tpu_custom_call.1} parent=39 // pred_check
          %p296 = pneg %p118
        $region54: #{tpu_custom_call.1} parent=39 // pred_check_branch
          %298 = sbr.rel (%p296) target = $region56
        $region55: #{tpu_custom_call.1} parent=39 // pred_region
          %299 = dma.done %s292, 4096
        $region56: #{tpu_custom_call.1} parent=39 // pred_fallthru
          _
        // Predicated region
        $region57: #{tpu_custom_call.1} parent=39 // pred_check
          %p300 = pneg %p139
        $region58: #{tpu_custom_call.1} parent=39 // pred_check_branch
          %302 = sbr.rel (%p300) target = $region60
        $region59: #{tpu_custom_call.1} parent=39 // pred_region
          %303 = dma.done [#allocation9], 16
        $region60: #{tpu_custom_call.1} parent=39 // pred_fallthru
          _
        %p304 = pneg %p40
        %p305 = pneg %p37
        %s306 = sand.u32 %s24, 1
        %s307 = scalar_lea.sflag [#allocation6], %s306
        %s308 = sand.u32 %s53, 1
        %s309 = smul.addr %s308, 3072
        %s310 = scalar_lea.vmem [#allocation5], %s309
        %p311 = pneg %p66
        %p312 = pneg %p63
        %s313 = sand.u32 %s24, 1
        %s314 = scalar_lea.sflag [#allocation6], %s313
        %s315 = sand.u32 %s79, 1
        %s316 = smul.addr %s315, 4
        %s317 = scalar_lea.vmem [#allocation7], %s316
        %p318 = pneg %p92
        %p319 = pneg %p89
        %s320 = sand.u32 %s24, 1
        %s321 = scalar_lea.sflag [#allocation9], %s320
        %s322 = sand.u32 %s105, 1
        %s323 = smul.addr %s322, 256
        %s324 = scalar_lea.vmem [#allocation8], %s323
        %p325 = pneg %p118
        %p326 = pneg %p115
        %p327 = pneg %p139
        %p328 = pneg %p136
        %p329 = pneg %p160
        %p330 = pneg %p157
        %s331 = smul.u32 4, %s24
        %s332 = smul.u32 4, %s24
        %s333 = smul.u32 64, %s24
        %p335 = scmp.eq.s32.totalorder %s24, 0
        // Predicated region
        $region61: #{tpu_custom_call.1} parent=39 // pred_check
          %p336 = pneg %p335
        $region62: #{tpu_custom_call.1} parent=39 // pred_check_branch
          %338 = sbr.rel (%p336) target = $region64
        $region63: #{tpu_custom_call.1} parent=39 // pred_region
          %339 = vst [vmem:[#allocation11] sm:$0xff] 0.0
        $region64: #{tpu_custom_call.1} parent=39 // pred_fallthru
          _
        %v340 = vld [vmem:[#allocation2] sm:$0xff]
        %v341 = vld [vmem:[#allocation2 + $0x8] sm:$0xff]
        %v342 = vld [vmem:[#allocation2 + $0x10] sm:$0xff]
        %v343 = vld [vmem:[#allocation2 + $0x18] sm:$0xff]
        %v344 = vld [vmem:[#allocation2 + $0x20] sm:$0xff]
        %v345 = vld [vmem:[#allocation2 + $0x28] sm:$0xff]
        %v346 = vld [vmem:[#allocation2 + $0x30] sm:$0xff]
        %v347 = vld [vmem:[#allocation2 + $0x38] sm:$0xff]
        %v348 = vld [vmem:[#allocation2 + $0x40] sm:$0xff]
        %v349 = vld [vmem:[#allocation2 + $0x48] sm:$0xff]
        %v350 = vld [vmem:[#allocation2 + $0x50] sm:$0xff]
        %v351 = vld [vmem:[#allocation2 + $0x58] sm:$0xff]
        %v352 = vpack.c.bf16 %v340, %v340
        %v353 = vpack.c.bf16 %v341, %v341
        %v354 = vpack.c.bf16 %v342, %v342
        %v355 = vpack.c.bf16 %v343, %v343
        %v356 = vpack.c.bf16 %v344, %v344
        %v357 = vpack.c.bf16 %v345, %v345
        %v358 = vpack.c.bf16 %v346, %v346
        %v359 = vpack.c.bf16 %v347, %v347
        %v360 = vpack.c.bf16 %v348, %v348
        %v361 = vpack.c.bf16 %v349, %v349
        %v362 = vpack.c.bf16 %v350, %v350
        %v363 = vpack.c.bf16 %v351, %v351
        %v364 = vld [vmem:[%s277] sm:$0xff]
        %v365 = vld [vmem:[%s277 + $0x8] sm:$0xff]
        %v366 = vld [vmem:[%s277 + $0x10] sm:$0xff]
        %v367 = vld [vmem:[%s277 + $0x18] sm:$0xff]
        %v368 = vld [vmem:[%s277 + $0x20] sm:$0xff]
        %v369 = vld [vmem:[%s277 + $0x28] sm:$0xff]
        %v370 = vld [vmem:[%s277 + $0x30] sm:$0xff]
        %v371 = vld [vmem:[%s277 + $0x38] sm:$0xff]
        %v372 = vld [vmem:[%s277 + $0x40] sm:$0xff]
        %v373 = vld [vmem:[%s277 + $0x48] sm:$0xff]
        %v374 = vld [vmem:[%s277 + $0x50] sm:$0xff]
        %v375 = vld [vmem:[%s277 + $0x58] sm:$0xff]
        %v376 = vld [vmem:[%s277 + $0x60] sm:$0xff]
        %v377 = vld [vmem:[%s277 + $0x68] sm:$0xff]
        %v378 = vld [vmem:[%s277 + $0x70] sm:$0xff]
        %v379 = vld [vmem:[%s277 + $0x78] sm:$0xff]
        %v380 = vld [vmem:[%s277 + $0x80] sm:$0xff]
        %v381 = vld [vmem:[%s277 + $0x88] sm:$0xff]
        %v382 = vld [vmem:[%s277 + $0x90] sm:$0xff]
        %v383 = vld [vmem:[%s277 + $0x98] sm:$0xff]
        %v384 = vld [vmem:[%s277 + $0xa0] sm:$0xff]
        %v385 = vld [vmem:[%s277 + $0xa8] sm:$0xff]
        %v386 = vld [vmem:[%s277 + $0xb0] sm:$0xff]
        %v387 = vld [vmem:[%s277 + $0xb8] sm:$0xff]
        %v388 = vld [vmem:[%s277 + $0xc0] sm:$0xff]
        %v389 = vld [vmem:[%s277 + $0xc8] sm:$0xff]
        %v390 = vld [vmem:[%s277 + $0xd0] sm:$0xff]
        %v391 = vld [vmem:[%s277 + $0xd8] sm:$0xff]
        %v392 = vld [vmem:[%s277 + $0xe0] sm:$0xff]
        %v393 = vld [vmem:[%s277 + $0xe8] sm:$0xff]
        %v394 = vld [vmem:[%s277 + $0xf0] sm:$0xff]
        %v395 = vld [vmem:[%s277 + $0xf8] sm:$0xff]
        %v396 = vld [vmem:[%s277 + $0x100] sm:$0xff]
        %v397 = vld [vmem:[%s277 + $0x108] sm:$0xff]
        %v398 = vld [vmem:[%s277 + $0x110] sm:$0xff]
        %v399 = vld [vmem:[%s277 + $0x118] sm:$0xff]
        %v400 = vld [vmem:[%s277 + $0x120] sm:$0xff]
        %v401 = vld [vmem:[%s277 + $0x128] sm:$0xff]
        %v402 = vld [vmem:[%s277 + $0x130] sm:$0xff]
        %v403 = vld [vmem:[%s277 + $0x138] sm:$0xff]
        %v404 = vld [vmem:[%s277 + $0x140] sm:$0xff]
        %v405 = vld [vmem:[%s277 + $0x148] sm:$0xff]
        %v406 = vld [vmem:[%s277 + $0x150] sm:$0xff]
        %v407 = vld [vmem:[%s277 + $0x158] sm:$0xff]
        %v408 = vld [vmem:[%s277 + $0x160] sm:$0xff]
        %v409 = vld [vmem:[%s277 + $0x168] sm:$0xff]
        %v410 = vld [vmem:[%s277 + $0x170] sm:$0xff]
        %v411 = vld [vmem:[%s277 + $0x178] sm:$0xff]
        %v412 = vld [vmem:[%s277 + $0x180] sm:$0xff]
        %v413 = vld [vmem:[%s277 + $0x188] sm:$0xff]
        %v414 = vld [vmem:[%s277 + $0x190] sm:$0xff]
        %v415 = vld [vmem:[%s277 + $0x198] sm:$0xff]
        %v416 = vld [vmem:[%s277 + $0x1a0] sm:$0xff]
        %v417 = vld [vmem:[%s277 + $0x1a8] sm:$0xff]
        %v418 = vld [vmem:[%s277 + $0x1b0] sm:$0xff]
        %v419 = vld [vmem:[%s277 + $0x1b8] sm:$0xff]
        %v420 = vld [vmem:[%s277 + $0x1c0] sm:$0xff]
        %v421 = vld [vmem:[%s277 + $0x1c8] sm:$0xff]
        %v422 = vld [vmem:[%s277 + $0x1d0] sm:$0xff]
        %v423 = vld [vmem:[%s277 + $0x1d8] sm:$0xff]
        %v424 = vld [vmem:[%s277 + $0x1e0] sm:$0xff]
        %v425 = vld [vmem:[%s277 + $0x1e8] sm:$0xff]
        %v426 = vld [vmem:[%s277 + $0x1f0] sm:$0xff]
        %v427 = vld [vmem:[%s277 + $0x1f8] sm:$0xff]
        %v428 = vld [vmem:[%s277 + $0x200] sm:$0xff]
        %v429 = vld [vmem:[%s277 + $0x208] sm:$0xff]
        %v430 = vld [vmem:[%s277 + $0x210] sm:$0xff]
        %v431 = vld [vmem:[%s277 + $0x218] sm:$0xff]
        %v432 = vld [vmem:[%s277 + $0x220] sm:$0xff]
        %v433 = vld [vmem:[%s277 + $0x228] sm:$0xff]
        %v434 = vld [vmem:[%s277 + $0x230] sm:$0xff]
        %v435 = vld [vmem:[%s277 + $0x238] sm:$0xff]
        %v436 = vld [vmem:[%s277 + $0x240] sm:$0xff]
        %v437 = vld [vmem:[%s277 + $0x248] sm:$0xff]
        %v438 = vld [vmem:[%s277 + $0x250] sm:$0xff]
        %v439 = vld [vmem:[%s277 + $0x258] sm:$0xff]
        %v440 = vld [vmem:[%s277 + $0x260] sm:$0xff]
        %v441 = vld [vmem:[%s277 + $0x268] sm:$0xff]
        %v442 = vld [vmem:[%s277 + $0x270] sm:$0xff]
        %v443 = vld [vmem:[%s277 + $0x278] sm:$0xff]
        %v444 = vld [vmem:[%s277 + $0x280] sm:$0xff]
        %v445 = vld [vmem:[%s277 + $0x288] sm:$0xff]
        %v446 = vld [vmem:[%s277 + $0x290] sm:$0xff]
        %v447 = vld [vmem:[%s277 + $0x298] sm:$0xff]
        %v448 = vld [vmem:[%s277 + $0x2a0] sm:$0xff]
        %v449 = vld [vmem:[%s277 + $0x2a8] sm:$0xff]
        %v450 = vld [vmem:[%s277 + $0x2b0] sm:$0xff]
        %v451 = vld [vmem:[%s277 + $0x2b8] sm:$0xff]
        %v452 = vld [vmem:[%s277 + $0x2c0] sm:$0xff]
        %v453 = vld [vmem:[%s277 + $0x2c8] sm:$0xff]
        %v454 = vld [vmem:[%s277 + $0x2d0] sm:$0xff]
        %v455 = vld [vmem:[%s277 + $0x2d8] sm:$0xff]
        %v456 = vld [vmem:[%s277 + $0x2e0] sm:$0xff]
        %v457 = vld [vmem:[%s277 + $0x2e8] sm:$0xff]
        %v458 = vld [vmem:[%s277 + $0x2f0] sm:$0xff]
        %v459 = vld [vmem:[%s277 + $0x2f8] sm:$0xff]
        %v460 = vld [vmem:[%s277 + $0x300] sm:$0xff]
        %v461 = vld [vmem:[%s277 + $0x308] sm:$0xff]
        %v462 = vld [vmem:[%s277 + $0x310] sm:$0xff]
        %v463 = vld [vmem:[%s277 + $0x318] sm:$0xff]
        %v464 = vld [vmem:[%s277 + $0x320] sm:$0xff]
        %v465 = vld [vmem:[%s277 + $0x328] sm:$0xff]
        %v466 = vld [vmem:[%s277 + $0x330] sm:$0xff]
        %v467 = vld [vmem:[%s277 + $0x338] sm:$0xff]
        %v468 = vld [vmem:[%s277 + $0x340] sm:$0xff]
        %v469 = vld [vmem:[%s277 + $0x348] sm:$0xff]
        %v470 = vld [vmem:[%s277 + $0x350] sm:$0xff]
        %v471 = vld [vmem:[%s277 + $0x358] sm:$0xff]
        %v472 = vld [vmem:[%s277 + $0x360] sm:$0xff]
        %v473 = vld [vmem:[%s277 + $0x368] sm:$0xff]
        %v474 = vld [vmem:[%s277 + $0x370] sm:$0xff]
        %v475 = vld [vmem:[%s277 + $0x378] sm:$0xff]
        %v476 = vld [vmem:[%s277 + $0x380] sm:$0xff]
        %v477 = vld [vmem:[%s277 + $0x388] sm:$0xff]
        %v478 = vld [vmem:[%s277 + $0x390] sm:$0xff]
        %v479 = vld [vmem:[%s277 + $0x398] sm:$0xff]
        %v480 = vld [vmem:[%s277 + $0x3a0] sm:$0xff]
        %v481 = vld [vmem:[%s277 + $0x3a8] sm:$0xff]
        %v482 = vld [vmem:[%s277 + $0x3b0] sm:$0xff]
        %v483 = vld [vmem:[%s277 + $0x3b8] sm:$0xff]
        %v484 = vld [vmem:[%s277 + $0x3c0] sm:$0xff]
        %v485 = vld [vmem:[%s277 + $0x3c8] sm:$0xff]
        %v486 = vld [vmem:[%s277 + $0x3d0] sm:$0xff]
        %v487 = vld [vmem:[%s277 + $0x3d8] sm:$0xff]
        %v488 = vld [vmem:[%s277 + $0x3e0] sm:$0xff]
        %v489 = vld [vmem:[%s277 + $0x3e8] sm:$0xff]
        %v490 = vld [vmem:[%s277 + $0x3f0] sm:$0xff]
        %v491 = vld [vmem:[%s277 + $0x3f8] sm:$0xff]
        %v492 = vld [vmem:[%s277 + $0x400] sm:$0xff]
        %v493 = vld [vmem:[%s277 + $0x408] sm:$0xff]
        %v494 = vld [vmem:[%s277 + $0x410] sm:$0xff]
        %v495 = vld [vmem:[%s277 + $0x418] sm:$0xff]
        %v496 = vld [vmem:[%s277 + $0x420] sm:$0xff]
        %v497 = vld [vmem:[%s277 + $0x428] sm:$0xff]
        %v498 = vld [vmem:[%s277 + $0x430] sm:$0xff]
        %v499 = vld [vmem:[%s277 + $0x438] sm:$0xff]
        %v500 = vld [vmem:[%s277 + $0x440] sm:$0xff]
        %v501 = vld [vmem:[%s277 + $0x448] sm:$0xff]
        %v502 = vld [vmem:[%s277 + $0x450] sm:$0xff]
        %v503 = vld [vmem:[%s277 + $0x458] sm:$0xff]
        %v504 = vld [vmem:[%s277 + $0x460] sm:$0xff]
        %v505 = vld [vmem:[%s277 + $0x468] sm:$0xff]
        %v506 = vld [vmem:[%s277 + $0x470] sm:$0xff]
        %v507 = vld [vmem:[%s277 + $0x478] sm:$0xff]
        %v508 = vld [vmem:[%s277 + $0x480] sm:$0xff]
        %v509 = vld [vmem:[%s277 + $0x488] sm:$0xff]
        %v510 = vld [vmem:[%s277 + $0x490] sm:$0xff]
        %v511 = vld [vmem:[%s277 + $0x498] sm:$0xff]
        %v512 = vld [vmem:[%s277 + $0x4a0] sm:$0xff]
        %v513 = vld [vmem:[%s277 + $0x4a8] sm:$0xff]
        %v514 = vld [vmem:[%s277 + $0x4b0] sm:$0xff]
        %v515 = vld [vmem:[%s277 + $0x4b8] sm:$0xff]
        %v516 = vld [vmem:[%s277 + $0x4c0] sm:$0xff]
        %v517 = vld [vmem:[%s277 + $0x4c8] sm:$0xff]
        %v518 = vld [vmem:[%s277 + $0x4d0] sm:$0xff]
        %v519 = vld [vmem:[%s277 + $0x4d8] sm:$0xff]
        %v520 = vld [vmem:[%s277 + $0x4e0] sm:$0xff]
        %v521 = vld [vmem:[%s277 + $0x4e8] sm:$0xff]
        %v522 = vld [vmem:[%s277 + $0x4f0] sm:$0xff]
        %v523 = vld [vmem:[%s277 + $0x4f8] sm:$0xff]
        %v524 = vld [vmem:[%s277 + $0x500] sm:$0xff]
        %v525 = vld [vmem:[%s277 + $0x508] sm:$0xff]
        %v526 = vld [vmem:[%s277 + $0x510] sm:$0xff]
        %v527 = vld [vmem:[%s277 + $0x518] sm:$0xff]
        %v528 = vld [vmem:[%s277 + $0x520] sm:$0xff]
        %v529 = vld [vmem:[%s277 + $0x528] sm:$0xff]
        %v530 = vld [vmem:[%s277 + $0x530] sm:$0xff]
        %v531 = vld [vmem:[%s277 + $0x538] sm:$0xff]
        %v532 = vld [vmem:[%s277 + $0x540] sm:$0xff]
        %v533 = vld [vmem:[%s277 + $0x548] sm:$0xff]
        %v534 = vld [vmem:[%s277 + $0x550] sm:$0xff]
        %v535 = vld [vmem:[%s277 + $0x558] sm:$0xff]
        %v536 = vld [vmem:[%s277 + $0x560] sm:$0xff]
        %v537 = vld [vmem:[%s277 + $0x568] sm:$0xff]
        %v538 = vld [vmem:[%s277 + $0x570] sm:$0xff]
        %v539 = vld [vmem:[%s277 + $0x578] sm:$0xff]
        %v540 = vld [vmem:[%s277 + $0x580] sm:$0xff]
        %v541 = vld [vmem:[%s277 + $0x588] sm:$0xff]
        %v542 = vld [vmem:[%s277 + $0x590] sm:$0xff]
        %v543 = vld [vmem:[%s277 + $0x598] sm:$0xff]
        %v544 = vld [vmem:[%s277 + $0x5a0] sm:$0xff]
        %v545 = vld [vmem:[%s277 + $0x5a8] sm:$0xff]
        %v546 = vld [vmem:[%s277 + $0x5b0] sm:$0xff]
        %v547 = vld [vmem:[%s277 + $0x5b8] sm:$0xff]
        %v548 = vld [vmem:[%s277 + $0x5c0] sm:$0xff]
        %v549 = vld [vmem:[%s277 + $0x5c8] sm:$0xff]
        %v550 = vld [vmem:[%s277 + $0x5d0] sm:$0xff]
        %v551 = vld [vmem:[%s277 + $0x5d8] sm:$0xff]
        %v552 = vld [vmem:[%s277 + $0x5e0] sm:$0xff]
        %v553 = vld [vmem:[%s277 + $0x5e8] sm:$0xff]
        %v554 = vld [vmem:[%s277 + $0x5f0] sm:$0xff]
        %v555 = vld [vmem:[%s277 + $0x5f8] sm:$0xff]
        %v556 = vld [vmem:[%s277 + $0x600] sm:$0xff]
        %v557 = vld [vmem:[%s277 + $0x608] sm:$0xff]
        %v558 = vld [vmem:[%s277 + $0x610] sm:$0xff]
        %v559 = vld [vmem:[%s277 + $0x618] sm:$0xff]
        %v560 = vld [vmem:[%s277 + $0x620] sm:$0xff]
        %v561 = vld [vmem:[%s277 + $0x628] sm:$0xff]
        %v562 = vld [vmem:[%s277 + $0x630] sm:$0xff]
        %v563 = vld [vmem:[%s277 + $0x638] sm:$0xff]
        %v564 = vld [vmem:[%s277 + $0x640] sm:$0xff]
        %v565 = vld [vmem:[%s277 + $0x648] sm:$0xff]
        %v566 = vld [vmem:[%s277 + $0x650] sm:$0xff]
        %v567 = vld [vmem:[%s277 + $0x658] sm:$0xff]
        %v568 = vld [vmem:[%s277 + $0x660] sm:$0xff]
        %v569 = vld [vmem:[%s277 + $0x668] sm:$0xff]
        %v570 = vld [vmem:[%s277 + $0x670] sm:$0xff]
        %v571 = vld [vmem:[%s277 + $0x678] sm:$0xff]
        %v572 = vld [vmem:[%s277 + $0x680] sm:$0xff]
        %v573 = vld [vmem:[%s277 + $0x688] sm:$0xff]
        %v574 = vld [vmem:[%s277 + $0x690] sm:$0xff]
        %v575 = vld [vmem:[%s277 + $0x698] sm:$0xff]
        %v576 = vld [vmem:[%s277 + $0x6a0] sm:$0xff]
        %v577 = vld [vmem:[%s277 + $0x6a8] sm:$0xff]
        %v578 = vld [vmem:[%s277 + $0x6b0] sm:$0xff]
        %v579 = vld [vmem:[%s277 + $0x6b8] sm:$0xff]
        %v580 = vld [vmem:[%s277 + $0x6c0] sm:$0xff]
        %v581 = vld [vmem:[%s277 + $0x6c8] sm:$0xff]
        %v582 = vld [vmem:[%s277 + $0x6d0] sm:$0xff]
        %v583 = vld [vmem:[%s277 + $0x6d8] sm:$0xff]
        %v584 = vld [vmem:[%s277 + $0x6e0] sm:$0xff]
        %v585 = vld [vmem:[%s277 + $0x6e8] sm:$0xff]
        %v586 = vld [vmem:[%s277 + $0x6f0] sm:$0xff]
        %v587 = vld [vmem:[%s277 + $0x6f8] sm:$0xff]
        %v588 = vld [vmem:[%s277 + $0x700] sm:$0xff]
        %v589 = vld [vmem:[%s277 + $0x708] sm:$0xff]
        %v590 = vld [vmem:[%s277 + $0x710] sm:$0xff]
        %v591 = vld [vmem:[%s277 + $0x718] sm:$0xff]
        %v592 = vld [vmem:[%s277 + $0x720] sm:$0xff]
        %v593 = vld [vmem:[%s277 + $0x728] sm:$0xff]
        %v594 = vld [vmem:[%s277 + $0x730] sm:$0xff]
        %v595 = vld [vmem:[%s277 + $0x738] sm:$0xff]
        %v596 = vld [vmem:[%s277 + $0x740] sm:$0xff]
        %v597 = vld [vmem:[%s277 + $0x748] sm:$0xff]
        %v598 = vld [vmem:[%s277 + $0x750] sm:$0xff]
        %v599 = vld [vmem:[%s277 + $0x758] sm:$0xff]
        %v600 = vld [vmem:[%s277 + $0x760] sm:$0xff]
        %v601 = vld [vmem:[%s277 + $0x768] sm:$0xff]
        %v602 = vld [vmem:[%s277 + $0x770] sm:$0xff]
        %v603 = vld [vmem:[%s277 + $0x778] sm:$0xff]
        %v604 = vld [vmem:[%s277 + $0x780] sm:$0xff]
        %v605 = vld [vmem:[%s277 + $0x788] sm:$0xff]
        %v606 = vld [vmem:[%s277 + $0x790] sm:$0xff]
        %v607 = vld [vmem:[%s277 + $0x798] sm:$0xff]
        %v608 = vld [vmem:[%s277 + $0x7a0] sm:$0xff]
        %v609 = vld [vmem:[%s277 + $0x7a8] sm:$0xff]
        %v610 = vld [vmem:[%s277 + $0x7b0] sm:$0xff]
        %v611 = vld [vmem:[%s277 + $0x7b8] sm:$0xff]
        %v612 = vld [vmem:[%s277 + $0x7c0] sm:$0xff]
        %v613 = vld [vmem:[%s277 + $0x7c8] sm:$0xff]
        %v614 = vld [vmem:[%s277 + $0x7d0] sm:$0xff]
        %v615 = vld [vmem:[%s277 + $0x7d8] sm:$0xff]
        %v616 = vld [vmem:[%s277 + $0x7e0] sm:$0xff]
        %v617 = vld [vmem:[%s277 + $0x7e8] sm:$0xff]
        %v618 = vld [vmem:[%s277 + $0x7f0] sm:$0xff]
        %v619 = vld [vmem:[%s277 + $0x7f8] sm:$0xff]
        %v620 = vld [vmem:[%s277 + $0x800] sm:$0xff]
        %v621 = vld [vmem:[%s277 + $0x808] sm:$0xff]
        %v622 = vld [vmem:[%s277 + $0x810] sm:$0xff]
        %v623 = vld [vmem:[%s277 + $0x818] sm:$0xff]
        %v624 = vld [vmem:[%s277 + $0x820] sm:$0xff]
        %v625 = vld [vmem:[%s277 + $0x828] sm:$0xff]
        %v626 = vld [vmem:[%s277 + $0x830] sm:$0xff]
        %v627 = vld [vmem:[%s277 + $0x838] sm:$0xff]
        %v628 = vld [vmem:[%s277 + $0x840] sm:$0xff]
        %v629 = vld [vmem:[%s277 + $0x848] sm:$0xff]
        %v630 = vld [vmem:[%s277 + $0x850] sm:$0xff]
        %v631 = vld [vmem:[%s277 + $0x858] sm:$0xff]
        %v632 = vld [vmem:[%s277 + $0x860] sm:$0xff]
        %v633 = vld [vmem:[%s277 + $0x868] sm:$0xff]
        %v634 = vld [vmem:[%s277 + $0x870] sm:$0xff]
        %v635 = vld [vmem:[%s277 + $0x878] sm:$0xff]
        %v636 = vld [vmem:[%s277 + $0x880] sm:$0xff]
        %v637 = vld [vmem:[%s277 + $0x888] sm:$0xff]
        %v638 = vld [vmem:[%s277 + $0x890] sm:$0xff]
        %v639 = vld [vmem:[%s277 + $0x898] sm:$0xff]
        %v640 = vld [vmem:[%s277 + $0x8a0] sm:$0xff]
        %v641 = vld [vmem:[%s277 + $0x8a8] sm:$0xff]
        %v642 = vld [vmem:[%s277 + $0x8b0] sm:$0xff]
        %v643 = vld [vmem:[%s277 + $0x8b8] sm:$0xff]
        %v644 = vld [vmem:[%s277 + $0x8c0] sm:$0xff]
        %v645 = vld [vmem:[%s277 + $0x8c8] sm:$0xff]
        %v646 = vld [vmem:[%s277 + $0x8d0] sm:$0xff]
        %v647 = vld [vmem:[%s277 + $0x8d8] sm:$0xff]
        %v648 = vld [vmem:[%s277 + $0x8e0] sm:$0xff]
        %v649 = vld [vmem:[%s277 + $0x8e8] sm:$0xff]
        %v650 = vld [vmem:[%s277 + $0x8f0] sm:$0xff]
        %v651 = vld [vmem:[%s277 + $0x8f8] sm:$0xff]
        %v652 = vld [vmem:[%s277 + $0x900] sm:$0xff]
        %v653 = vld [vmem:[%s277 + $0x908] sm:$0xff]
        %v654 = vld [vmem:[%s277 + $0x910] sm:$0xff]
        %v655 = vld [vmem:[%s277 + $0x918] sm:$0xff]
        %v656 = vld [vmem:[%s277 + $0x920] sm:$0xff]
        %v657 = vld [vmem:[%s277 + $0x928] sm:$0xff]
        %v658 = vld [vmem:[%s277 + $0x930] sm:$0xff]
        %v659 = vld [vmem:[%s277 + $0x938] sm:$0xff]
        %v660 = vld [vmem:[%s277 + $0x940] sm:$0xff]
        %v661 = vld [vmem:[%s277 + $0x948] sm:$0xff]
        %v662 = vld [vmem:[%s277 + $0x950] sm:$0xff]
        %v663 = vld [vmem:[%s277 + $0x958] sm:$0xff]
        %v664 = vld [vmem:[%s277 + $0x960] sm:$0xff]
        %v665 = vld [vmem:[%s277 + $0x968] sm:$0xff]
        %v666 = vld [vmem:[%s277 + $0x970] sm:$0xff]
        %v667 = vld [vmem:[%s277 + $0x978] sm:$0xff]
        %v668 = vld [vmem:[%s277 + $0x980] sm:$0xff]
        %v669 = vld [vmem:[%s277 + $0x988] sm:$0xff]
        %v670 = vld [vmem:[%s277 + $0x990] sm:$0xff]
        %v671 = vld [vmem:[%s277 + $0x998] sm:$0xff]
        %v672 = vld [vmem:[%s277 + $0x9a0] sm:$0xff]
        %v673 = vld [vmem:[%s277 + $0x9a8] sm:$0xff]
        %v674 = vld [vmem:[%s277 + $0x9b0] sm:$0xff]
        %v675 = vld [vmem:[%s277 + $0x9b8] sm:$0xff]
        %v676 = vld [vmem:[%s277 + $0x9c0] sm:$0xff]
        %v677 = vld [vmem:[%s277 + $0x9c8] sm:$0xff]
        %v678 = vld [vmem:[%s277 + $0x9d0] sm:$0xff]
        %v679 = vld [vmem:[%s277 + $0x9d8] sm:$0xff]
        %v680 = vld [vmem:[%s277 + $0x9e0] sm:$0xff]
        %v681 = vld [vmem:[%s277 + $0x9e8] sm:$0xff]
        %v682 = vld [vmem:[%s277 + $0x9f0] sm:$0xff]
        %v683 = vld [vmem:[%s277 + $0x9f8] sm:$0xff]
        %v684 = vld [vmem:[%s277 + $0xa00] sm:$0xff]
        %v685 = vld [vmem:[%s277 + $0xa08] sm:$0xff]
        %v686 = vld [vmem:[%s277 + $0xa10] sm:$0xff]
        %v687 = vld [vmem:[%s277 + $0xa18] sm:$0xff]
        %v688 = vld [vmem:[%s277 + $0xa20] sm:$0xff]
        %v689 = vld [vmem:[%s277 + $0xa28] sm:$0xff]
        %v690 = vld [vmem:[%s277 + $0xa30] sm:$0xff]
        %v691 = vld [vmem:[%s277 + $0xa38] sm:$0xff]
        %v692 = vld [vmem:[%s277 + $0xa40] sm:$0xff]
        %v693 = vld [vmem:[%s277 + $0xa48] sm:$0xff]
        %v694 = vld [vmem:[%s277 + $0xa50] sm:$0xff]
        %v695 = vld [vmem:[%s277 + $0xa58] sm:$0xff]
        %v696 = vld [vmem:[%s277 + $0xa60] sm:$0xff]
        %v697 = vld [vmem:[%s277 + $0xa68] sm:$0xff]
        %v698 = vld [vmem:[%s277 + $0xa70] sm:$0xff]
        %v699 = vld [vmem:[%s277 + $0xa78] sm:$0xff]
        %v700 = vld [vmem:[%s277 + $0xa80] sm:$0xff]
        %v701 = vld [vmem:[%s277 + $0xa88] sm:$0xff]
        %v702 = vld [vmem:[%s277 + $0xa90] sm:$0xff]
        %v703 = vld [vmem:[%s277 + $0xa98] sm:$0xff]
        %v704 = vld [vmem:[%s277 + $0xaa0] sm:$0xff]
        %v705 = vld [vmem:[%s277 + $0xaa8] sm:$0xff]
        %v706 = vld [vmem:[%s277 + $0xab0] sm:$0xff]
        %v707 = vld [vmem:[%s277 + $0xab8] sm:$0xff]
        %v708 = vld [vmem:[%s277 + $0xac0] sm:$0xff]
        %v709 = vld [vmem:[%s277 + $0xac8] sm:$0xff]
        %v710 = vld [vmem:[%s277 + $0xad0] sm:$0xff]
        %v711 = vld [vmem:[%s277 + $0xad8] sm:$0xff]
        %v712 = vld [vmem:[%s277 + $0xae0] sm:$0xff]
        %v713 = vld [vmem:[%s277 + $0xae8] sm:$0xff]
        %v714 = vld [vmem:[%s277 + $0xaf0] sm:$0xff]
        %v715 = vld [vmem:[%s277 + $0xaf8] sm:$0xff]
        %v716 = vld [vmem:[%s277 + $0xb00] sm:$0xff]
        %v717 = vld [vmem:[%s277 + $0xb08] sm:$0xff]
        %v718 = vld [vmem:[%s277 + $0xb10] sm:$0xff]
        %v719 = vld [vmem:[%s277 + $0xb18] sm:$0xff]
        %v720 = vld [vmem:[%s277 + $0xb20] sm:$0xff]
        %v721 = vld [vmem:[%s277 + $0xb28] sm:$0xff]
        %v722 = vld [vmem:[%s277 + $0xb30] sm:$0xff]
        %v723 = vld [vmem:[%s277 + $0xb38] sm:$0xff]
        %v724 = vld [vmem:[%s277 + $0xb40] sm:$0xff]
        %v725 = vld [vmem:[%s277 + $0xb48] sm:$0xff]
        %v726 = vld [vmem:[%s277 + $0xb50] sm:$0xff]
        %v727 = vld [vmem:[%s277 + $0xb58] sm:$0xff]
        %v728 = vld [vmem:[%s277 + $0xb60] sm:$0xff]
        %v729 = vld [vmem:[%s277 + $0xb68] sm:$0xff]
        %v730 = vld [vmem:[%s277 + $0xb70] sm:$0xff]
        %v731 = vld [vmem:[%s277 + $0xb78] sm:$0xff]
        %v732 = vld [vmem:[%s277 + $0xb80] sm:$0xff]
        %v733 = vld [vmem:[%s277 + $0xb88] sm:$0xff]
        %v734 = vld [vmem:[%s277 + $0xb90] sm:$0xff]
        %v735 = vld [vmem:[%s277 + $0xb98] sm:$0xff]
        %v736 = vld [vmem:[%s277 + $0xba0] sm:$0xff]
        %v737 = vld [vmem:[%s277 + $0xba8] sm:$0xff]
        %v738 = vld [vmem:[%s277 + $0xbb0] sm:$0xff]
        %v739 = vld [vmem:[%s277 + $0xbb8] sm:$0xff]
        %v740 = vld [vmem:[%s277 + $0xbc0] sm:$0xff]
        %v741 = vld [vmem:[%s277 + $0xbc8] sm:$0xff]
        %v742 = vld [vmem:[%s277 + $0xbd0] sm:$0xff]
        %v743 = vld [vmem:[%s277 + $0xbd8] sm:$0xff]
        %v744 = vld [vmem:[%s277 + $0xbe0] sm:$0xff]
        %v745 = vld [vmem:[%s277 + $0xbe8] sm:$0xff]
        %v746 = vld [vmem:[%s277 + $0xbf0] sm:$0xff]
        %v747 = vld [vmem:[%s277 + $0xbf8] sm:$0xff]
        %v748 = vld [vmem:[%s286] sm:$0xf]
        %v750 = vlaneseq
        %v751 = vshrl.u32 %v750, 7
        %v752 = vsub.s32 0, %v751
        %v753 = vrot.slane %v748, %v752
        %v754 = vlaneseq
        %v755 = vshrl.u32 %v754, 7
        %v756 = vsub.s32 1, %v755
        %v757 = vrot.slane %v748, %v756
        %v758 = vlaneseq
        %v759 = vshrl.u32 %v758, 7
        %v760 = vsub.s32 2, %v759
        %v761 = vrot.slane %v748, %v760
        %v762 = vlaneseq
        %v763 = vshrl.u32 %v762, 7
        %v764 = vsub.s32 3, %v763
        %v765 = vrot.slane %v748, %v764
        %v1154 = vunpack.c.l.b16 %v364
        %v1155 = vunpack.c.h.b16 %v364
        %v1156 = vunpack.c.l.b16 %v365
        %v1157 = vunpack.c.h.b16 %v365
        %v1158 = vunpack.c.l.b16 %v366
        %v1159 = vunpack.c.h.b16 %v366
        %v1160 = vunpack.c.l.b16 %v367
        %v1161 = vunpack.c.h.b16 %v367
        %v1162 = vunpack.c.l.b16 %v368
        %v1163 = vunpack.c.h.b16 %v368
        %v1164 = vunpack.c.l.b16 %v369
        %v1165 = vunpack.c.h.b16 %v369
        %v1166 = vunpack.c.l.b16 %v370
        %v1167 = vunpack.c.h.b16 %v370
        %v1168 = vunpack.c.l.b16 %v371
        %v1169 = vunpack.c.h.b16 %v371
        %v1170 = vunpack.c.l.b16 %v372
        %v1171 = vunpack.c.h.b16 %v372
        %v1172 = vunpack.c.l.b16 %v373
        %v1173 = vunpack.c.h.b16 %v373
        %v1174 = vunpack.c.l.b16 %v374
        %v1175 = vunpack.c.h.b16 %v374
        %v1176 = vunpack.c.l.b16 %v375
        %v1177 = vunpack.c.h.b16 %v375
        %v1178 = vunpack.c.l.b16 %v376
        %v1179 = vunpack.c.h.b16 %v376
        %v1180 = vunpack.c.l.b16 %v377
        %v1181 = vunpack.c.h.b16 %v377
        %v1182 = vunpack.c.l.b16 %v378
        %v1183 = vunpack.c.h.b16 %v378
        %v1184 = vunpack.c.l.b16 %v379
        %v1185 = vunpack.c.h.b16 %v379
        %v1186 = vunpack.c.l.b16 %v380
        %v1187 = vunpack.c.h.b16 %v380
        %v1188 = vunpack.c.l.b16 %v381
        %v1189 = vunpack.c.h.b16 %v381
        %v1190 = vunpack.c.l.b16 %v382
        %v1191 = vunpack.c.h.b16 %v382
        %v1192 = vunpack.c.l.b16 %v383
        %v1193 = vunpack.c.h.b16 %v383
        %v1194 = vunpack.c.l.b16 %v384
        %v1195 = vunpack.c.h.b16 %v384
        %v1196 = vunpack.c.l.b16 %v385
        %v1197 = vunpack.c.h.b16 %v385
        %v1198 = vunpack.c.l.b16 %v386
        %v1199 = vunpack.c.h.b16 %v386
        %v1200 = vunpack.c.l.b16 %v387
        %v1201 = vunpack.c.h.b16 %v387
        %v1202 = vunpack.c.l.b16 %v388
        %v1203 = vunpack.c.h.b16 %v388
        %v1204 = vunpack.c.l.b16 %v389
        %v1205 = vunpack.c.h.b16 %v389
        %v1206 = vunpack.c.l.b16 %v390
        %v1207 = vunpack.c.h.b16 %v390
        %v1208 = vunpack.c.l.b16 %v391
        %v1209 = vunpack.c.h.b16 %v391
        %v1210 = vunpack.c.l.b16 %v392
        %v1211 = vunpack.c.h.b16 %v392
        %v1212 = vunpack.c.l.b16 %v393
        %v1213 = vunpack.c.h.b16 %v393
        %v1214 = vunpack.c.l.b16 %v394
        %v1215 = vunpack.c.h.b16 %v394
        %v1216 = vunpack.c.l.b16 %v395
        %v1217 = vunpack.c.h.b16 %v395
        %v1218 = vunpack.c.l.b16 %v396
        %v1219 = vunpack.c.h.b16 %v396
        %v1220 = vunpack.c.l.b16 %v397
        %v1221 = vunpack.c.h.b16 %v397
        %v1222 = vunpack.c.l.b16 %v398
        %v1223 = vunpack.c.h.b16 %v398
        %v1224 = vunpack.c.l.b16 %v399
        %v1225 = vunpack.c.h.b16 %v399
        %v1226 = vunpack.c.l.b16 %v400
        %v1227 = vunpack.c.h.b16 %v400
        %v1228 = vunpack.c.l.b16 %v401
        %v1229 = vunpack.c.h.b16 %v401
        %v1230 = vunpack.c.l.b16 %v402
        %v1231 = vunpack.c.h.b16 %v402
        %v1232 = vunpack.c.l.b16 %v403
        %v1233 = vunpack.c.h.b16 %v403
        %v1234 = vunpack.c.l.b16 %v404
        %v1235 = vunpack.c.h.b16 %v404
        %v1236 = vunpack.c.l.b16 %v405
        %v1237 = vunpack.c.h.b16 %v405
        %v1238 = vunpack.c.l.b16 %v406
        %v1239 = vunpack.c.h.b16 %v406
        %v1240 = vunpack.c.l.b16 %v407
        %v1241 = vunpack.c.h.b16 %v407
        %v1242 = vunpack.c.l.b16 %v408
        %v1243 = vunpack.c.h.b16 %v408
        %v1244 = vunpack.c.l.b16 %v409
        %v1245 = vunpack.c.h.b16 %v409
        %v1246 = vunpack.c.l.b16 %v410
        %v1247 = vunpack.c.h.b16 %v410
        %v1248 = vunpack.c.l.b16 %v411
        %v1249 = vunpack.c.h.b16 %v411
        %v1250 = vunpack.c.l.b16 %v412
        %v1251 = vunpack.c.h.b16 %v412
        %v1252 = vunpack.c.l.b16 %v413
        %v1253 = vunpack.c.h.b16 %v413
        %v1254 = vunpack.c.l.b16 %v414
        %v1255 = vunpack.c.h.b16 %v414
        %v1256 = vunpack.c.l.b16 %v415
        %v1257 = vunpack.c.h.b16 %v415
        %v1258 = vunpack.c.l.b16 %v416
        %v1259 = vunpack.c.h.b16 %v416
        %v1260 = vunpack.c.l.b16 %v417
        %v1261 = vunpack.c.h.b16 %v417
        %v1262 = vunpack.c.l.b16 %v418
        %v1263 = vunpack.c.h.b16 %v418
        %v1264 = vunpack.c.l.b16 %v419
        %v1265 = vunpack.c.h.b16 %v419
        %v1266 = vunpack.c.l.b16 %v420
        %v1267 = vunpack.c.h.b16 %v420
        %v1268 = vunpack.c.l.b16 %v421
        %v1269 = vunpack.c.h.b16 %v421
        %v1270 = vunpack.c.l.b16 %v422
        %v1271 = vunpack.c.h.b16 %v422
        %v1272 = vunpack.c.l.b16 %v423
        %v1273 = vunpack.c.h.b16 %v423
        %v1274 = vunpack.c.l.b16 %v424
        %v1275 = vunpack.c.h.b16 %v424
        %v1276 = vunpack.c.l.b16 %v425
        %v1277 = vunpack.c.h.b16 %v425
        %v1278 = vunpack.c.l.b16 %v426
        %v1279 = vunpack.c.h.b16 %v426
        %v1280 = vunpack.c.l.b16 %v427
        %v1281 = vunpack.c.h.b16 %v427
        %v1282 = vunpack.c.l.b16 %v428
        %v1283 = vunpack.c.h.b16 %v428
        %v1284 = vunpack.c.l.b16 %v429
        %v1285 = vunpack.c.h.b16 %v429
        %v1286 = vunpack.c.l.b16 %v430
        %v1287 = vunpack.c.h.b16 %v430
        %v1288 = vunpack.c.l.b16 %v431
        %v1289 = vunpack.c.h.b16 %v431
        %v1290 = vunpack.c.l.b16 %v432
        %v1291 = vunpack.c.h.b16 %v432
        %v1292 = vunpack.c.l.b16 %v433
        %v1293 = vunpack.c.h.b16 %v433
        %v1294 = vunpack.c.l.b16 %v434
        %v1295 = vunpack.c.h.b16 %v434
        %v1296 = vunpack.c.l.b16 %v435
        %v1297 = vunpack.c.h.b16 %v435
        %v1298 = vunpack.c.l.b16 %v436
        %v1299 = vunpack.c.h.b16 %v436
        %v1300 = vunpack.c.l.b16 %v437
        %v1301 = vunpack.c.h.b16 %v437
        %v1302 = vunpack.c.l.b16 %v438
        %v1303 = vunpack.c.h.b16 %v438
        %v1304 = vunpack.c.l.b16 %v439
        %v1305 = vunpack.c.h.b16 %v439
        %v1306 = vunpack.c.l.b16 %v440
        %v1307 = vunpack.c.h.b16 %v440
        %v1308 = vunpack.c.l.b16 %v441
        %v1309 = vunpack.c.h.b16 %v441
        %v1310 = vunpack.c.l.b16 %v442
        %v1311 = vunpack.c.h.b16 %v442
        %v1312 = vunpack.c.l.b16 %v443
        %v1313 = vunpack.c.h.b16 %v443
        %v1314 = vunpack.c.l.b16 %v444
        %v1315 = vunpack.c.h.b16 %v444
        %v1316 = vunpack.c.l.b16 %v445
        %v1317 = vunpack.c.h.b16 %v445
        %v1318 = vunpack.c.l.b16 %v446
        %v1319 = vunpack.c.h.b16 %v446
        %v1320 = vunpack.c.l.b16 %v447
        %v1321 = vunpack.c.h.b16 %v447
        %v1322 = vunpack.c.l.b16 %v448
        %v1323 = vunpack.c.h.b16 %v448
        %v1324 = vunpack.c.l.b16 %v449
        %v1325 = vunpack.c.h.b16 %v449
        %v1326 = vunpack.c.l.b16 %v450
        %v1327 = vunpack.c.h.b16 %v450
        %v1328 = vunpack.c.l.b16 %v451
        %v1329 = vunpack.c.h.b16 %v451
        %v1330 = vunpack.c.l.b16 %v452
        %v1331 = vunpack.c.h.b16 %v452
        %v1332 = vunpack.c.l.b16 %v453
        %v1333 = vunpack.c.h.b16 %v453
        %v1334 = vunpack.c.l.b16 %v454
        %v1335 = vunpack.c.h.b16 %v454
        %v1336 = vunpack.c.l.b16 %v455
        %v1337 = vunpack.c.h.b16 %v455
        %v1338 = vunpack.c.l.b16 %v456
        %v1339 = vunpack.c.h.b16 %v456
        %v1340 = vunpack.c.l.b16 %v457
        %v1341 = vunpack.c.h.b16 %v457
        %v1342 = vunpack.c.l.b16 %v458
        %v1343 = vunpack.c.h.b16 %v458
        %v1344 = vunpack.c.l.b16 %v459
        %v1345 = vunpack.c.h.b16 %v459
        %v1346 = vunpack.c.l.b16 %v460
        %v1347 = vunpack.c.h.b16 %v460
        %v1348 = vunpack.c.l.b16 %v461
        %v1349 = vunpack.c.h.b16 %v461
        %v1350 = vunpack.c.l.b16 %v462
        %v1351 = vunpack.c.h.b16 %v462
        %v1352 = vunpack.c.l.b16 %v463
        %v1353 = vunpack.c.h.b16 %v463
        %v1354 = vunpack.c.l.b16 %v464
        %v1355 = vunpack.c.h.b16 %v464
        %v1356 = vunpack.c.l.b16 %v465
        %v1357 = vunpack.c.h.b16 %v465
        %v1358 = vunpack.c.l.b16 %v466
        %v1359 = vunpack.c.h.b16 %v466
        %v1360 = vunpack.c.l.b16 %v467
        %v1361 = vunpack.c.h.b16 %v467
        %v1362 = vunpack.c.l.b16 %v468
        %v1363 = vunpack.c.h.b16 %v468
        %v1364 = vunpack.c.l.b16 %v469
        %v1365 = vunpack.c.h.b16 %v469
        %v1366 = vunpack.c.l.b16 %v470
        %v1367 = vunpack.c.h.b16 %v470
        %v1368 = vunpack.c.l.b16 %v471
        %v1369 = vunpack.c.h.b16 %v471
        %v1370 = vunpack.c.l.b16 %v472
        %v1371 = vunpack.c.h.b16 %v472
        %v1372 = vunpack.c.l.b16 %v473
        %v1373 = vunpack.c.h.b16 %v473
        %v1374 = vunpack.c.l.b16 %v474
        %v1375 = vunpack.c.h.b16 %v474
        %v1376 = vunpack.c.l.b16 %v475
        %v1377 = vunpack.c.h.b16 %v475
        %v1378 = vunpack.c.l.b16 %v476
        %v1379 = vunpack.c.h.b16 %v476
        %v1380 = vunpack.c.l.b16 %v477
        %v1381 = vunpack.c.h.b16 %v477
        %v1382 = vunpack.c.l.b16 %v478
        %v1383 = vunpack.c.h.b16 %v478
        %v1384 = vunpack.c.l.b16 %v479
        %v1385 = vunpack.c.h.b16 %v479
        %v1386 = vunpack.c.l.b16 %v480
        %v1387 = vunpack.c.h.b16 %v480
        %v1388 = vunpack.c.l.b16 %v481
        %v1389 = vunpack.c.h.b16 %v481
        %v1390 = vunpack.c.l.b16 %v482
        %v1391 = vunpack.c.h.b16 %v482
        %v1392 = vunpack.c.l.b16 %v483
        %v1393 = vunpack.c.h.b16 %v483
        %v1394 = vunpack.c.l.b16 %v484
        %v1395 = vunpack.c.h.b16 %v484
        %v1396 = vunpack.c.l.b16 %v485
        %v1397 = vunpack.c.h.b16 %v485
        %v1398 = vunpack.c.l.b16 %v486
        %v1399 = vunpack.c.h.b16 %v486
        %v1400 = vunpack.c.l.b16 %v487
        %v1401 = vunpack.c.h.b16 %v487
        %v1402 = vunpack.c.l.b16 %v488
        %v1403 = vunpack.c.h.b16 %v488
        %v1404 = vunpack.c.l.b16 %v489
        %v1405 = vunpack.c.h.b16 %v489
        %v1406 = vunpack.c.l.b16 %v490
        %v1407 = vunpack.c.h.b16 %v490
        %v1408 = vunpack.c.l.b16 %v491
        %v1409 = vunpack.c.h.b16 %v491
        %v1410 = vunpack.c.l.b16 %v492
        %v1411 = vunpack.c.h.b16 %v492
        %v1412 = vunpack.c.l.b16 %v493
        %v1413 = vunpack.c.h.b16 %v493
        %v1414 = vunpack.c.l.b16 %v494
        %v1415 = vunpack.c.h.b16 %v494
        %v1416 = vunpack.c.l.b16 %v495
        %v1417 = vunpack.c.h.b16 %v495
        %v1418 = vunpack.c.l.b16 %v496
        %v1419 = vunpack.c.h.b16 %v496
        %v1420 = vunpack.c.l.b16 %v497
        %v1421 = vunpack.c.h.b16 %v497
        %v1422 = vunpack.c.l.b16 %v498
        %v1423 = vunpack.c.h.b16 %v498
        %v1424 = vunpack.c.l.b16 %v499
        %v1425 = vunpack.c.h.b16 %v499
        %v1426 = vunpack.c.l.b16 %v500
        %v1427 = vunpack.c.h.b16 %v500
        %v1428 = vunpack.c.l.b16 %v501
        %v1429 = vunpack.c.h.b16 %v501
        %v1430 = vunpack.c.l.b16 %v502
        %v1431 = vunpack.c.h.b16 %v502
        %v1432 = vunpack.c.l.b16 %v503
        %v1433 = vunpack.c.h.b16 %v503
        %v1434 = vunpack.c.l.b16 %v504
        %v1435 = vunpack.c.h.b16 %v504
        %v1436 = vunpack.c.l.b16 %v505
        %v1437 = vunpack.c.h.b16 %v505
        %v1438 = vunpack.c.l.b16 %v506
        %v1439 = vunpack.c.h.b16 %v506
        %v1440 = vunpack.c.l.b16 %v507
        %v1441 = vunpack.c.h.b16 %v507
        %v1442 = vunpack.c.l.b16 %v508
        %v1443 = vunpack.c.h.b16 %v508
        %v1444 = vunpack.c.l.b16 %v509
        %v1445 = vunpack.c.h.b16 %v509
        %v1446 = vunpack.c.l.b16 %v510
        %v1447 = vunpack.c.h.b16 %v510
        %v1448 = vunpack.c.l.b16 %v511
        %v1449 = vunpack.c.h.b16 %v511
        %v1450 = vunpack.c.l.b16 %v512
        %v1451 = vunpack.c.h.b16 %v512
        %v1452 = vunpack.c.l.b16 %v513
        %v1453 = vunpack.c.h.b16 %v513
        %v1454 = vunpack.c.l.b16 %v514
        %v1455 = vunpack.c.h.b16 %v514
        %v1456 = vunpack.c.l.b16 %v515
        %v1457 = vunpack.c.h.b16 %v515
        %v1458 = vunpack.c.l.b16 %v516
        %v1459 = vunpack.c.h.b16 %v516
        %v1460 = vunpack.c.l.b16 %v517
        %v1461 = vunpack.c.h.b16 %v517
        %v1462 = vunpack.c.l.b16 %v518
        %v1463 = vunpack.c.h.b16 %v518
        %v1464 = vunpack.c.l.b16 %v519
        %v1465 = vunpack.c.h.b16 %v519
        %v1466 = vunpack.c.l.b16 %v520
        %v1467 = vunpack.c.h.b16 %v520
        %v1468 = vunpack.c.l.b16 %v521
        %v1469 = vunpack.c.h.b16 %v521
        %v1470 = vunpack.c.l.b16 %v522
        %v1471 = vunpack.c.h.b16 %v522
        %v1472 = vunpack.c.l.b16 %v523
        %v1473 = vunpack.c.h.b16 %v523
        %v1474 = vunpack.c.l.b16 %v524
        %v1475 = vunpack.c.h.b16 %v524
        %v1476 = vunpack.c.l.b16 %v525
        %v1477 = vunpack.c.h.b16 %v525
        %v1478 = vunpack.c.l.b16 %v526
        %v1479 = vunpack.c.h.b16 %v526
        %v1480 = vunpack.c.l.b16 %v527
        %v1481 = vunpack.c.h.b16 %v527
        %v1482 = vunpack.c.l.b16 %v528
        %v1483 = vunpack.c.h.b16 %v528
        %v1484 = vunpack.c.l.b16 %v529
        %v1485 = vunpack.c.h.b16 %v529
        %v1486 = vunpack.c.l.b16 %v530
        %v1487 = vunpack.c.h.b16 %v530
        %v1488 = vunpack.c.l.b16 %v531
        %v1489 = vunpack.c.h.b16 %v531
        %v1490 = vunpack.c.l.b16 %v532
        %v1491 = vunpack.c.h.b16 %v532
        %v1492 = vunpack.c.l.b16 %v533
        %v1493 = vunpack.c.h.b16 %v533
        %v1494 = vunpack.c.l.b16 %v534
        %v1495 = vunpack.c.h.b16 %v534
        %v1496 = vunpack.c.l.b16 %v535
        %v1497 = vunpack.c.h.b16 %v535
        %v1498 = vunpack.c.l.b16 %v536
        %v1499 = vunpack.c.h.b16 %v536
        %v1500 = vunpack.c.l.b16 %v537
        %v1501 = vunpack.c.h.b16 %v537
        %v1502 = vunpack.c.l.b16 %v538
        %v1503 = vunpack.c.h.b16 %v538
        %v1504 = vunpack.c.l.b16 %v539
        %v1505 = vunpack.c.h.b16 %v539
        %v1506 = vunpack.c.l.b16 %v540
        %v1507 = vunpack.c.h.b16 %v540
        %v1508 = vunpack.c.l.b16 %v541
        %v1509 = vunpack.c.h.b16 %v541
        %v1510 = vunpack.c.l.b16 %v542
        %v1511 = vunpack.c.h.b16 %v542
        %v1512 = vunpack.c.l.b16 %v543
        %v1513 = vunpack.c.h.b16 %v543
        %v1514 = vunpack.c.l.b16 %v544
        %v1515 = vunpack.c.h.b16 %v544
        %v1516 = vunpack.c.l.b16 %v545
        %v1517 = vunpack.c.h.b16 %v545
        %v1518 = vunpack.c.l.b16 %v546
        %v1519 = vunpack.c.h.b16 %v546
        %v1520 = vunpack.c.l.b16 %v547
        %v1521 = vunpack.c.h.b16 %v547
        %v1522 = vunpack.c.l.b16 %v548
        %v1523 = vunpack.c.h.b16 %v548
        %v1524 = vunpack.c.l.b16 %v549
        %v1525 = vunpack.c.h.b16 %v549
        %v1526 = vunpack.c.l.b16 %v550
        %v1527 = vunpack.c.h.b16 %v550
        %v1528 = vunpack.c.l.b16 %v551
        %v1529 = vunpack.c.h.b16 %v551
        %v1530 = vunpack.c.l.b16 %v552
        %v1531 = vunpack.c.h.b16 %v552
        %v1532 = vunpack.c.l.b16 %v553
        %v1533 = vunpack.c.h.b16 %v553
        %v1534 = vunpack.c.l.b16 %v554
        %v1535 = vunpack.c.h.b16 %v554
        %v1536 = vunpack.c.l.b16 %v555
        %v1537 = vunpack.c.h.b16 %v555
        %v1538 = vunpack.c.l.b16 %v556
        %v1539 = vunpack.c.h.b16 %v556
        %v1540 = vunpack.c.l.b16 %v557
        %v1541 = vunpack.c.h.b16 %v557
        %v1542 = vunpack.c.l.b16 %v558
        %v1543 = vunpack.c.h.b16 %v558
        %v1544 = vunpack.c.l.b16 %v559
        %v1545 = vunpack.c.h.b16 %v559
        %v1546 = vunpack.c.l.b16 %v560
        %v1547 = vunpack.c.h.b16 %v560
        %v1548 = vunpack.c.l.b16 %v561
        %v1549 = vunpack.c.h.b16 %v561
        %v1550 = vunpack.c.l.b16 %v562
        %v1551 = vunpack.c.h.b16 %v562
        %v1552 = vunpack.c.l.b16 %v563
        %v1553 = vunpack.c.h.b16 %v563
        %v1554 = vunpack.c.l.b16 %v564
        %v1555 = vunpack.c.h.b16 %v564
        %v1556 = vunpack.c.l.b16 %v565
        %v1557 = vunpack.c.h.b16 %v565
        %v1558 = vunpack.c.l.b16 %v566
        %v1559 = vunpack.c.h.b16 %v566
        %v1560 = vunpack.c.l.b16 %v567
        %v1561 = vunpack.c.h.b16 %v567
        %v1562 = vunpack.c.l.b16 %v568
        %v1563 = vunpack.c.h.b16 %v568
        %v1564 = vunpack.c.l.b16 %v569
        %v1565 = vunpack.c.h.b16 %v569
        %v1566 = vunpack.c.l.b16 %v570
        %v1567 = vunpack.c.h.b16 %v570
        %v1568 = vunpack.c.l.b16 %v571
        %v1569 = vunpack.c.h.b16 %v571
        %v1570 = vunpack.c.l.b16 %v572
        %v1571 = vunpack.c.h.b16 %v572
        %v1572 = vunpack.c.l.b16 %v573
        %v1573 = vunpack.c.h.b16 %v573
        %v1574 = vunpack.c.l.b16 %v574
        %v1575 = vunpack.c.h.b16 %v574
        %v1576 = vunpack.c.l.b16 %v575
        %v1577 = vunpack.c.h.b16 %v575
        %v1578 = vunpack.c.l.b16 %v576
        %v1579 = vunpack.c.h.b16 %v576
        %v1580 = vunpack.c.l.b16 %v577
        %v1581 = vunpack.c.h.b16 %v577
        %v1582 = vunpack.c.l.b16 %v578
        %v1583 = vunpack.c.h.b16 %v578
        %v1584 = vunpack.c.l.b16 %v579
        %v1585 = vunpack.c.h.b16 %v579
        %v1586 = vunpack.c.l.b16 %v580
        %v1587 = vunpack.c.h.b16 %v580
        %v1588 = vunpack.c.l.b16 %v581
        %v1589 = vunpack.c.h.b16 %v581
        %v1590 = vunpack.c.l.b16 %v582
        %v1591 = vunpack.c.h.b16 %v582
        %v1592 = vunpack.c.l.b16 %v583
        %v1593 = vunpack.c.h.b16 %v583
        %v1594 = vunpack.c.l.b16 %v584
        %v1595 = vunpack.c.h.b16 %v584
        %v1596 = vunpack.c.l.b16 %v585
        %v1597 = vunpack.c.h.b16 %v585
        %v1598 = vunpack.c.l.b16 %v586
        %v1599 = vunpack.c.h.b16 %v586
        %v1600 = vunpack.c.l.b16 %v587
        %v1601 = vunpack.c.h.b16 %v587
        %v1602 = vunpack.c.l.b16 %v588
        %v1603 = vunpack.c.h.b16 %v588
        %v1604 = vunpack.c.l.b16 %v589
        %v1605 = vunpack.c.h.b16 %v589
        %v1606 = vunpack.c.l.b16 %v590
        %v1607 = vunpack.c.h.b16 %v590
        %v1608 = vunpack.c.l.b16 %v591
        %v1609 = vunpack.c.h.b16 %v591
        %v1610 = vunpack.c.l.b16 %v592
        %v1611 = vunpack.c.h.b16 %v592
        %v1612 = vunpack.c.l.b16 %v593
        %v1613 = vunpack.c.h.b16 %v593
        %v1614 = vunpack.c.l.b16 %v594
        %v1615 = vunpack.c.h.b16 %v594
        %v1616 = vunpack.c.l.b16 %v595
        %v1617 = vunpack.c.h.b16 %v595
        %v1618 = vunpack.c.l.b16 %v596
        %v1619 = vunpack.c.h.b16 %v596
        %v1620 = vunpack.c.l.b16 %v597
        %v1621 = vunpack.c.h.b16 %v597
        %v1622 = vunpack.c.l.b16 %v598
        %v1623 = vunpack.c.h.b16 %v598
        %v1624 = vunpack.c.l.b16 %v599
        %v1625 = vunpack.c.h.b16 %v599
        %v1626 = vunpack.c.l.b16 %v600
        %v1627 = vunpack.c.h.b16 %v600
        %v1628 = vunpack.c.l.b16 %v601
        %v1629 = vunpack.c.h.b16 %v601
        %v1630 = vunpack.c.l.b16 %v602
        %v1631 = vunpack.c.h.b16 %v602
        %v1632 = vunpack.c.l.b16 %v603
        %v1633 = vunpack.c.h.b16 %v603
        %v1634 = vunpack.c.l.b16 %v604
        %v1635 = vunpack.c.h.b16 %v604
        %v1636 = vunpack.c.l.b16 %v605
        %v1637 = vunpack.c.h.b16 %v605
        %v1638 = vunpack.c.l.b16 %v606
        %v1639 = vunpack.c.h.b16 %v606
        %v1640 = vunpack.c.l.b16 %v607
        %v1641 = vunpack.c.h.b16 %v607
        %v1642 = vunpack.c.l.b16 %v608
        %v1643 = vunpack.c.h.b16 %v608
        %v1644 = vunpack.c.l.b16 %v609
        %v1645 = vunpack.c.h.b16 %v609
        %v1646 = vunpack.c.l.b16 %v610
        %v1647 = vunpack.c.h.b16 %v610
        %v1648 = vunpack.c.l.b16 %v611
        %v1649 = vunpack.c.h.b16 %v611
        %v1650 = vunpack.c.l.b16 %v612
        %v1651 = vunpack.c.h.b16 %v612
        %v1652 = vunpack.c.l.b16 %v613
        %v1653 = vunpack.c.h.b16 %v613
        %v1654 = vunpack.c.l.b16 %v614
        %v1655 = vunpack.c.h.b16 %v614
        %v1656 = vunpack.c.l.b16 %v615
        %v1657 = vunpack.c.h.b16 %v615
        %v1658 = vunpack.c.l.b16 %v616
        %v1659 = vunpack.c.h.b16 %v616
        %v1660 = vunpack.c.l.b16 %v617
        %v1661 = vunpack.c.h.b16 %v617
        %v1662 = vunpack.c.l.b16 %v618
        %v1663 = vunpack.c.h.b16 %v618
        %v1664 = vunpack.c.l.b16 %v619
        %v1665 = vunpack.c.h.b16 %v619
        %v1666 = vunpack.c.l.b16 %v620
        %v1667 = vunpack.c.h.b16 %v620
        %v1668 = vunpack.c.l.b16 %v621
        %v1669 = vunpack.c.h.b16 %v621
        %v1670 = vunpack.c.l.b16 %v622
        %v1671 = vunpack.c.h.b16 %v622
        %v1672 = vunpack.c.l.b16 %v623
        %v1673 = vunpack.c.h.b16 %v623
        %v1674 = vunpack.c.l.b16 %v624
        %v1675 = vunpack.c.h.b16 %v624
        %v1676 = vunpack.c.l.b16 %v625
        %v1677 = vunpack.c.h.b16 %v625
        %v1678 = vunpack.c.l.b16 %v626
        %v1679 = vunpack.c.h.b16 %v626
        %v1680 = vunpack.c.l.b16 %v627
        %v1681 = vunpack.c.h.b16 %v627
        %v1682 = vunpack.c.l.b16 %v628
        %v1683 = vunpack.c.h.b16 %v628
        %v1684 = vunpack.c.l.b16 %v629
        %v1685 = vunpack.c.h.b16 %v629
        %v1686 = vunpack.c.l.b16 %v630
        %v1687 = vunpack.c.h.b16 %v630
        %v1688 = vunpack.c.l.b16 %v631
        %v1689 = vunpack.c.h.b16 %v631
        %v1690 = vunpack.c.l.b16 %v632
        %v1691 = vunpack.c.h.b16 %v632
        %v1692 = vunpack.c.l.b16 %v633
        %v1693 = vunpack.c.h.b16 %v633
        %v1694 = vunpack.c.l.b16 %v634
        %v1695 = vunpack.c.h.b16 %v634
        %v1696 = vunpack.c.l.b16 %v635
        %v1697 = vunpack.c.h.b16 %v635
        %v1698 = vunpack.c.l.b16 %v636
        %v1699 = vunpack.c.h.b16 %v636
        %v1700 = vunpack.c.l.b16 %v637
        %v1701 = vunpack.c.h.b16 %v637
        %v1702 = vunpack.c.l.b16 %v638
        %v1703 = vunpack.c.h.b16 %v638
        %v1704 = vunpack.c.l.b16 %v639
        %v1705 = vunpack.c.h.b16 %v639
        %v1706 = vunpack.c.l.b16 %v640
        %v1707 = vunpack.c.h.b16 %v640
        %v1708 = vunpack.c.l.b16 %v641
        %v1709 = vunpack.c.h.b16 %v641
        %v1710 = vunpack.c.l.b16 %v642
        %v1711 = vunpack.c.h.b16 %v642
        %v1712 = vunpack.c.l.b16 %v643
        %v1713 = vunpack.c.h.b16 %v643
        %v1714 = vunpack.c.l.b16 %v644
        %v1715 = vunpack.c.h.b16 %v644
        %v1716 = vunpack.c.l.b16 %v645
        %v1717 = vunpack.c.h.b16 %v645
        %v1718 = vunpack.c.l.b16 %v646
        %v1719 = vunpack.c.h.b16 %v646
        %v1720 = vunpack.c.l.b16 %v647
        %v1721 = vunpack.c.h.b16 %v647
        %v1722 = vunpack.c.l.b16 %v648
        %v1723 = vunpack.c.h.b16 %v648
        %v1724 = vunpack.c.l.b16 %v649
        %v1725 = vunpack.c.h.b16 %v649
        %v1726 = vunpack.c.l.b16 %v650
        %v1727 = vunpack.c.h.b16 %v650
        %v1728 = vunpack.c.l.b16 %v651
        %v1729 = vunpack.c.h.b16 %v651
        %v1730 = vunpack.c.l.b16 %v652
        %v1731 = vunpack.c.h.b16 %v652
        %v1732 = vunpack.c.l.b16 %v653
        %v1733 = vunpack.c.h.b16 %v653
        %v1734 = vunpack.c.l.b16 %v654
        %v1735 = vunpack.c.h.b16 %v654
        %v1736 = vunpack.c.l.b16 %v655
        %v1737 = vunpack.c.h.b16 %v655
        %v1738 = vunpack.c.l.b16 %v656
        %v1739 = vunpack.c.h.b16 %v656
        %v1740 = vunpack.c.l.b16 %v657
        %v1741 = vunpack.c.h.b16 %v657
        %v1742 = vunpack.c.l.b16 %v658
        %v1743 = vunpack.c.h.b16 %v658
        %v1744 = vunpack.c.l.b16 %v659
        %v1745 = vunpack.c.h.b16 %v659
        %v1746 = vunpack.c.l.b16 %v660
        %v1747 = vunpack.c.h.b16 %v660
        %v1748 = vunpack.c.l.b16 %v661
        %v1749 = vunpack.c.h.b16 %v661
        %v1750 = vunpack.c.l.b16 %v662
        %v1751 = vunpack.c.h.b16 %v662
        %v1752 = vunpack.c.l.b16 %v663
        %v1753 = vunpack.c.h.b16 %v663
        %v1754 = vunpack.c.l.b16 %v664
        %v1755 = vunpack.c.h.b16 %v664
        %v1756 = vunpack.c.l.b16 %v665
        %v1757 = vunpack.c.h.b16 %v665
        %v1758 = vunpack.c.l.b16 %v666
        %v1759 = vunpack.c.h.b16 %v666
        %v1760 = vunpack.c.l.b16 %v667
        %v1761 = vunpack.c.h.b16 %v667
        %v1762 = vunpack.c.l.b16 %v668
        %v1763 = vunpack.c.h.b16 %v668
        %v1764 = vunpack.c.l.b16 %v669
        %v1765 = vunpack.c.h.b16 %v669
        %v1766 = vunpack.c.l.b16 %v670
        %v1767 = vunpack.c.h.b16 %v670
        %v1768 = vunpack.c.l.b16 %v671
        %v1769 = vunpack.c.h.b16 %v671
        %v1770 = vunpack.c.l.b16 %v672
        %v1771 = vunpack.c.h.b16 %v672
        %v1772 = vunpack.c.l.b16 %v673
        %v1773 = vunpack.c.h.b16 %v673
        %v1774 = vunpack.c.l.b16 %v674
        %v1775 = vunpack.c.h.b16 %v674
        %v1776 = vunpack.c.l.b16 %v675
        %v1777 = vunpack.c.h.b16 %v675
        %v1778 = vunpack.c.l.b16 %v676
        %v1779 = vunpack.c.h.b16 %v676
        %v1780 = vunpack.c.l.b16 %v677
        %v1781 = vunpack.c.h.b16 %v677
        %v1782 = vunpack.c.l.b16 %v678
        %v1783 = vunpack.c.h.b16 %v678
        %v1784 = vunpack.c.l.b16 %v679
        %v1785 = vunpack.c.h.b16 %v679
        %v1786 = vunpack.c.l.b16 %v680
        %v1787 = vunpack.c.h.b16 %v680
        %v1788 = vunpack.c.l.b16 %v681
        %v1789 = vunpack.c.h.b16 %v681
        %v1790 = vunpack.c.l.b16 %v682
        %v1791 = vunpack.c.h.b16 %v682
        %v1792 = vunpack.c.l.b16 %v683
        %v1793 = vunpack.c.h.b16 %v683
        %v1794 = vunpack.c.l.b16 %v684
        %v1795 = vunpack.c.h.b16 %v684
        %v1796 = vunpack.c.l.b16 %v685
        %v1797 = vunpack.c.h.b16 %v685
        %v1798 = vunpack.c.l.b16 %v686
        %v1799 = vunpack.c.h.b16 %v686
        %v1800 = vunpack.c.l.b16 %v687
        %v1801 = vunpack.c.h.b16 %v687
        %v1802 = vunpack.c.l.b16 %v688
        %v1803 = vunpack.c.h.b16 %v688
        %v1804 = vunpack.c.l.b16 %v689
        %v1805 = vunpack.c.h.b16 %v689
        %v1806 = vunpack.c.l.b16 %v690
        %v1807 = vunpack.c.h.b16 %v690
        %v1808 = vunpack.c.l.b16 %v691
        %v1809 = vunpack.c.h.b16 %v691
        %v1810 = vunpack.c.l.b16 %v692
        %v1811 = vunpack.c.h.b16 %v692
        %v1812 = vunpack.c.l.b16 %v693
        %v1813 = vunpack.c.h.b16 %v693
        %v1814 = vunpack.c.l.b16 %v694
        %v1815 = vunpack.c.h.b16 %v694
        %v1816 = vunpack.c.l.b16 %v695
        %v1817 = vunpack.c.h.b16 %v695
        %v1818 = vunpack.c.l.b16 %v696
        %v1819 = vunpack.c.h.b16 %v696
        %v1820 = vunpack.c.l.b16 %v697
        %v1821 = vunpack.c.h.b16 %v697
        %v1822 = vunpack.c.l.b16 %v698
        %v1823 = vunpack.c.h.b16 %v698
        %v1824 = vunpack.c.l.b16 %v699
        %v1825 = vunpack.c.h.b16 %v699
        %v1826 = vunpack.c.l.b16 %v700
        %v1827 = vunpack.c.h.b16 %v700
        %v1828 = vunpack.c.l.b16 %v701
        %v1829 = vunpack.c.h.b16 %v701
        %v1830 = vunpack.c.l.b16 %v702
        %v1831 = vunpack.c.h.b16 %v702
        %v1832 = vunpack.c.l.b16 %v703
        %v1833 = vunpack.c.h.b16 %v703
        %v1834 = vunpack.c.l.b16 %v704
        %v1835 = vunpack.c.h.b16 %v704
        %v1836 = vunpack.c.l.b16 %v705
        %v1837 = vunpack.c.h.b16 %v705
        %v1838 = vunpack.c.l.b16 %v706
        %v1839 = vunpack.c.h.b16 %v706
        %v1840 = vunpack.c.l.b16 %v707
        %v1841 = vunpack.c.h.b16 %v707
        %v1842 = vunpack.c.l.b16 %v708
        %v1843 = vunpack.c.h.b16 %v708
        %v1844 = vunpack.c.l.b16 %v709
        %v1845 = vunpack.c.h.b16 %v709
        %v1846 = vunpack.c.l.b16 %v710
        %v1847 = vunpack.c.h.b16 %v710
        %v1848 = vunpack.c.l.b16 %v711
        %v1849 = vunpack.c.h.b16 %v711
        %v1850 = vunpack.c.l.b16 %v712
        %v1851 = vunpack.c.h.b16 %v712
        %v1852 = vunpack.c.l.b16 %v713
        %v1853 = vunpack.c.h.b16 %v713
        %v1854 = vunpack.c.l.b16 %v714
        %v1855 = vunpack.c.h.b16 %v714
        %v1856 = vunpack.c.l.b16 %v715
        %v1857 = vunpack.c.h.b16 %v715
        %v1858 = vunpack.c.l.b16 %v716
        %v1859 = vunpack.c.h.b16 %v716
        %v1860 = vunpack.c.l.b16 %v717
        %v1861 = vunpack.c.h.b16 %v717
        %v1862 = vunpack.c.l.b16 %v718
        %v1863 = vunpack.c.h.b16 %v718
        %v1864 = vunpack.c.l.b16 %v719
        %v1865 = vunpack.c.h.b16 %v719
        %v1866 = vunpack.c.l.b16 %v720
        %v1867 = vunpack.c.h.b16 %v720
        %v1868 = vunpack.c.l.b16 %v721
        %v1869 = vunpack.c.h.b16 %v721
        %v1870 = vunpack.c.l.b16 %v722
        %v1871 = vunpack.c.h.b16 %v722
        %v1872 = vunpack.c.l.b16 %v723
        %v1873 = vunpack.c.h.b16 %v723
        %v1874 = vunpack.c.l.b16 %v724
        %v1875 = vunpack.c.h.b16 %v724
        %v1876 = vunpack.c.l.b16 %v725
        %v1877 = vunpack.c.h.b16 %v725
        %v1878 = vunpack.c.l.b16 %v726
        %v1879 = vunpack.c.h.b16 %v726
        %v1880 = vunpack.c.l.b16 %v727
        %v1881 = vunpack.c.h.b16 %v727
        %v1882 = vunpack.c.l.b16 %v728
        %v1883 = vunpack.c.h.b16 %v728
        %v1884 = vunpack.c.l.b16 %v729
        %v1885 = vunpack.c.h.b16 %v729
        %v1886 = vunpack.c.l.b16 %v730
        %v1887 = vunpack.c.h.b16 %v730
        %v1888 = vunpack.c.l.b16 %v731
        %v1889 = vunpack.c.h.b16 %v731
        %v1890 = vunpack.c.l.b16 %v732
        %v1891 = vunpack.c.h.b16 %v732
        %v1892 = vunpack.c.l.b16 %v733
        %v1893 = vunpack.c.h.b16 %v733
        %v1894 = vunpack.c.l.b16 %v734
        %v1895 = vunpack.c.h.b16 %v734
        %v1896 = vunpack.c.l.b16 %v735
        %v1897 = vunpack.c.h.b16 %v735
        %v1898 = vunpack.c.l.b16 %v736
        %v1899 = vunpack.c.h.b16 %v736
        %v1900 = vunpack.c.l.b16 %v737
        %v1901 = vunpack.c.h.b16 %v737
        %v1902 = vunpack.c.l.b16 %v738
        %v1903 = vunpack.c.h.b16 %v738
        %v1904 = vunpack.c.l.b16 %v739
        %v1905 = vunpack.c.h.b16 %v739
        %v1906 = vunpack.c.l.b16 %v740
        %v1907 = vunpack.c.h.b16 %v740
        %v1908 = vunpack.c.l.b16 %v741
        %v1909 = vunpack.c.h.b16 %v741
        %v1910 = vunpack.c.l.b16 %v742
        %v1911 = vunpack.c.h.b16 %v742
        %v1912 = vunpack.c.l.b16 %v743
        %v1913 = vunpack.c.h.b16 %v743
        %v1914 = vunpack.c.l.b16 %v744
        %v1915 = vunpack.c.h.b16 %v744
        %v1916 = vunpack.c.l.b16 %v745
        %v1917 = vunpack.c.h.b16 %v745
        %v1918 = vunpack.c.l.b16 %v746
        %v1919 = vunpack.c.h.b16 %v746
        %v1920 = vunpack.c.l.b16 %v747
        %v1921 = vunpack.c.h.b16 %v747
        %v1922 = vpack.c.b16 %v1158, %v1154
        %v1923 = vpack.c.b16 %v1159, %v1155
        %v1924 = vpack.c.b16 %v1160, %v1156
        %v1925 = vpack.c.b16 %v1161, %v1157
        %v1926 = vpack.c.b16 %v1166, %v1162
        %v1927 = vpack.c.b16 %v1167, %v1163
        %v1928 = vpack.c.b16 %v1168, %v1164
        %v1929 = vpack.c.b16 %v1169, %v1165
        %v1930 = vpack.c.b16 %v1174, %v1170
        %v1931 = vpack.c.b16 %v1175, %v1171
        %v1932 = vpack.c.b16 %v1176, %v1172
        %v1933 = vpack.c.b16 %v1177, %v1173
        %v1934 = vpack.c.b16 %v1182, %v1178
        %v1935 = vpack.c.b16 %v1183, %v1179
        %v1936 = vpack.c.b16 %v1184, %v1180
        %v1937 = vpack.c.b16 %v1185, %v1181
        %v1938 = vpack.c.b16 %v1190, %v1186
        %v1939 = vpack.c.b16 %v1191, %v1187
        %v1940 = vpack.c.b16 %v1192, %v1188
        %v1941 = vpack.c.b16 %v1193, %v1189
        %v1942 = vpack.c.b16 %v1198, %v1194
        %v1943 = vpack.c.b16 %v1199, %v1195
        %v1944 = vpack.c.b16 %v1200, %v1196
        %v1945 = vpack.c.b16 %v1201, %v1197
        %v1946 = vpack.c.b16 %v1206, %v1202
        %v1947 = vpack.c.b16 %v1207, %v1203
        %v1948 = vpack.c.b16 %v1208, %v1204
        %v1949 = vpack.c.b16 %v1209, %v1205
        %v1950 = vpack.c.b16 %v1214, %v1210
        %v1951 = vpack.c.b16 %v1215, %v1211
        %v1952 = vpack.c.b16 %v1216, %v1212
        %v1953 = vpack.c.b16 %v1217, %v1213
        %v1954 = vpack.c.b16 %v1222, %v1218
        %v1955 = vpack.c.b16 %v1223, %v1219
        %v1956 = vpack.c.b16 %v1224, %v1220
        %v1957 = vpack.c.b16 %v1225, %v1221
        %v1958 = vpack.c.b16 %v1230, %v1226
        %v1959 = vpack.c.b16 %v1231, %v1227
        %v1960 = vpack.c.b16 %v1232, %v1228
        %v1961 = vpack.c.b16 %v1233, %v1229
        %v1962 = vpack.c.b16 %v1238, %v1234
        %v1963 = vpack.c.b16 %v1239, %v1235
        %v1964 = vpack.c.b16 %v1240, %v1236
        %v1965 = vpack.c.b16 %v1241, %v1237
        %v1966 = vpack.c.b16 %v1246, %v1242
        %v1967 = vpack.c.b16 %v1247, %v1243
        %v1968 = vpack.c.b16 %v1248, %v1244
        %v1969 = vpack.c.b16 %v1249, %v1245
        %v1970 = vpack.c.b16 %v1254, %v1250
        %v1971 = vpack.c.b16 %v1255, %v1251
        %v1972 = vpack.c.b16 %v1256, %v1252
        %v1973 = vpack.c.b16 %v1257, %v1253
        %v1974 = vpack.c.b16 %v1262, %v1258
        %v1975 = vpack.c.b16 %v1263, %v1259
        %v1976 = vpack.c.b16 %v1264, %v1260
        %v1977 = vpack.c.b16 %v1265, %v1261
        %v1978 = vpack.c.b16 %v1270, %v1266
        %v1979 = vpack.c.b16 %v1271, %v1267
        %v1980 = vpack.c.b16 %v1272, %v1268
        %v1981 = vpack.c.b16 %v1273, %v1269
        %v1982 = vpack.c.b16 %v1278, %v1274
        %v1983 = vpack.c.b16 %v1279, %v1275
        %v1984 = vpack.c.b16 %v1280, %v1276
        %v1985 = vpack.c.b16 %v1281, %v1277
        %v1986 = vpack.c.b16 %v1286, %v1282
        %v1987 = vpack.c.b16 %v1287, %v1283
        %v1988 = vpack.c.b16 %v1288, %v1284
        %v1989 = vpack.c.b16 %v1289, %v1285
        %v1990 = vpack.c.b16 %v1294, %v1290
        %v1991 = vpack.c.b16 %v1295, %v1291
        %v1992 = vpack.c.b16 %v1296, %v1292
        %v1993 = vpack.c.b16 %v1297, %v1293
        %v1994 = vpack.c.b16 %v1302, %v1298
        %v1995 = vpack.c.b16 %v1303, %v1299
        %v1996 = vpack.c.b16 %v1304, %v1300
        %v1997 = vpack.c.b16 %v1305, %v1301
        %v1998 = vpack.c.b16 %v1310, %v1306
        %v1999 = vpack.c.b16 %v1311, %v1307
        %v2000 = vpack.c.b16 %v1312, %v1308
        %v2001 = vpack.c.b16 %v1313, %v1309
        %v2002 = vpack.c.b16 %v1318, %v1314
        %v2003 = vpack.c.b16 %v1319, %v1315
        %v2004 = vpack.c.b16 %v1320, %v1316
        %v2005 = vpack.c.b16 %v1321, %v1317
        %v2006 = vpack.c.b16 %v1326, %v1322
        %v2007 = vpack.c.b16 %v1327, %v1323
        %v2008 = vpack.c.b16 %v1328, %v1324
        %v2009 = vpack.c.b16 %v1329, %v1325
        %v2010 = vpack.c.b16 %v1334, %v1330
        %v2011 = vpack.c.b16 %v1335, %v1331
        %v2012 = vpack.c.b16 %v1336, %v1332
        %v2013 = vpack.c.b16 %v1337, %v1333
        %v2014 = vpack.c.b16 %v1342, %v1338
        %v2015 = vpack.c.b16 %v1343, %v1339
        %v2016 = vpack.c.b16 %v1344, %v1340
        %v2017 = vpack.c.b16 %v1345, %v1341
        %v2018 = vpack.c.b16 %v1350, %v1346
        %v2019 = vpack.c.b16 %v1351, %v1347
        %v2020 = vpack.c.b16 %v1352, %v1348
        %v2021 = vpack.c.b16 %v1353, %v1349
        %v2022 = vpack.c.b16 %v1358, %v1354
        %v2023 = vpack.c.b16 %v1359, %v1355
        %v2024 = vpack.c.b16 %v1360, %v1356
        %v2025 = vpack.c.b16 %v1361, %v1357
        %v2026 = vpack.c.b16 %v1366, %v1362
        %v2027 = vpack.c.b16 %v1367, %v1363
        %v2028 = vpack.c.b16 %v1368, %v1364
        %v2029 = vpack.c.b16 %v1369, %v1365
        %v2030 = vpack.c.b16 %v1374, %v1370
        %v2031 = vpack.c.b16 %v1375, %v1371
        %v2032 = vpack.c.b16 %v1376, %v1372
        %v2033 = vpack.c.b16 %v1377, %v1373
        %v2034 = vpack.c.b16 %v1382, %v1378
        %v2035 = vpack.c.b16 %v1383, %v1379
        %v2036 = vpack.c.b16 %v1384, %v1380
        %v2037 = vpack.c.b16 %v1385, %v1381
        %v2038 = vpack.c.b16 %v1390, %v1386
        %v2039 = vpack.c.b16 %v1391, %v1387
        %v2040 = vpack.c.b16 %v1392, %v1388
        %v2041 = vpack.c.b16 %v1393, %v1389
        %v2042 = vpack.c.b16 %v1398, %v1394
        %v2043 = vpack.c.b16 %v1399, %v1395
        %v2044 = vpack.c.b16 %v1400, %v1396
        %v2045 = vpack.c.b16 %v1401, %v1397
        %v2046 = vpack.c.b16 %v1406, %v1402
        %v2047 = vpack.c.b16 %v1407, %v1403
        %v2048 = vpack.c.b16 %v1408, %v1404
        %v2049 = vpack.c.b16 %v1409, %v1405
        %v2050 = vpack.c.b16 %v1414, %v1410
        %v2051 = vpack.c.b16 %v1415, %v1411
        %v2052 = vpack.c.b16 %v1416, %v1412
        %v2053 = vpack.c.b16 %v1417, %v1413
        %v2054 = vpack.c.b16 %v1422, %v1418
        %v2055 = vpack.c.b16 %v1423, %v1419
        %v2056 = vpack.c.b16 %v1424, %v1420
        %v2057 = vpack.c.b16 %v1425, %v1421
        %v2058 = vpack.c.b16 %v1430, %v1426
        %v2059 = vpack.c.b16 %v1431, %v1427
        %v2060 = vpack.c.b16 %v1432, %v1428
        %v2061 = vpack.c.b16 %v1433, %v1429
        %v2062 = vpack.c.b16 %v1438, %v1434
        %v2063 = vpack.c.b16 %v1439, %v1435
        %v2064 = vpack.c.b16 %v1440, %v1436
        %v2065 = vpack.c.b16 %v1441, %v1437
        %v2066 = vpack.c.b16 %v1446, %v1442
        %v2067 = vpack.c.b16 %v1447, %v1443
        %v2068 = vpack.c.b16 %v1448, %v1444
        %v2069 = vpack.c.b16 %v1449, %v1445
        %v2070 = vpack.c.b16 %v1454, %v1450
        %v2071 = vpack.c.b16 %v1455, %v1451
        %v2072 = vpack.c.b16 %v1456, %v1452
        %v2073 = vpack.c.b16 %v1457, %v1453
        %v2074 = vpack.c.b16 %v1462, %v1458
        %v2075 = vpack.c.b16 %v1463, %v1459
        %v2076 = vpack.c.b16 %v1464, %v1460
        %v2077 = vpack.c.b16 %v1465, %v1461
        %v2078 = vpack.c.b16 %v1470, %v1466
        %v2079 = vpack.c.b16 %v1471, %v1467
        %v2080 = vpack.c.b16 %v1472, %v1468
        %v2081 = vpack.c.b16 %v1473, %v1469
        %v2082 = vpack.c.b16 %v1478, %v1474
        %v2083 = vpack.c.b16 %v1479, %v1475
        %v2084 = vpack.c.b16 %v1480, %v1476
        %v2085 = vpack.c.b16 %v1481, %v1477
        %v2086 = vpack.c.b16 %v1486, %v1482
        %v2087 = vpack.c.b16 %v1487, %v1483
        %v2088 = vpack.c.b16 %v1488, %v1484
        %v2089 = vpack.c.b16 %v1489, %v1485
        %v2090 = vpack.c.b16 %v1494, %v1490
        %v2091 = vpack.c.b16 %v1495, %v1491
        %v2092 = vpack.c.b16 %v1496, %v1492
        %v2093 = vpack.c.b16 %v1497, %v1493
        %v2094 = vpack.c.b16 %v1502, %v1498
        %v2095 = vpack.c.b16 %v1503, %v1499
        %v2096 = vpack.c.b16 %v1504, %v1500
        %v2097 = vpack.c.b16 %v1505, %v1501
        %v2098 = vpack.c.b16 %v1510, %v1506
        %v2099 = vpack.c.b16 %v1511, %v1507
        %v2100 = vpack.c.b16 %v1512, %v1508
        %v2101 = vpack.c.b16 %v1513, %v1509
        %v2102 = vpack.c.b16 %v1518, %v1514
        %v2103 = vpack.c.b16 %v1519, %v1515
        %v2104 = vpack.c.b16 %v1520, %v1516
        %v2105 = vpack.c.b16 %v1521, %v1517
        %v2106 = vpack.c.b16 %v1526, %v1522
        %v2107 = vpack.c.b16 %v1527, %v1523
        %v2108 = vpack.c.b16 %v1528, %v1524
        %v2109 = vpack.c.b16 %v1529, %v1525
        %v2110 = vpack.c.b16 %v1534, %v1530
        %v2111 = vpack.c.b16 %v1535, %v1531
        %v2112 = vpack.c.b16 %v1536, %v1532
        %v2113 = vpack.c.b16 %v1537, %v1533
        %v2114 = vpack.c.b16 %v1542, %v1538
        %v2115 = vpack.c.b16 %v1543, %v1539
        %v2116 = vpack.c.b16 %v1544, %v1540
        %v2117 = vpack.c.b16 %v1545, %v1541
        %v2118 = vpack.c.b16 %v1550, %v1546
        %v2119 = vpack.c.b16 %v1551, %v1547
        %v2120 = vpack.c.b16 %v1552, %v1548
        %v2121 = vpack.c.b16 %v1553, %v1549
        %v2122 = vpack.c.b16 %v1558, %v1554
        %v2123 = vpack.c.b16 %v1559, %v1555
        %v2124 = vpack.c.b16 %v1560, %v1556
        %v2125 = vpack.c.b16 %v1561, %v1557
        %v2126 = vpack.c.b16 %v1566, %v1562
        %v2127 = vpack.c.b16 %v1567, %v1563
        %v2128 = vpack.c.b16 %v1568, %v1564
        %v2129 = vpack.c.b16 %v1569, %v1565
        %v2130 = vpack.c.b16 %v1574, %v1570
        %v2131 = vpack.c.b16 %v1575, %v1571
        %v2132 = vpack.c.b16 %v1576, %v1572
        %v2133 = vpack.c.b16 %v1577, %v1573
        %v2134 = vpack.c.b16 %v1582, %v1578
        %v2135 = vpack.c.b16 %v1583, %v1579
        %v2136 = vpack.c.b16 %v1584, %v1580
        %v2137 = vpack.c.b16 %v1585, %v1581
        %v2138 = vpack.c.b16 %v1590, %v1586
        %v2139 = vpack.c.b16 %v1591, %v1587
        %v2140 = vpack.c.b16 %v1592, %v1588
        %v2141 = vpack.c.b16 %v1593, %v1589
        %v2142 = vpack.c.b16 %v1598, %v1594
        %v2143 = vpack.c.b16 %v1599, %v1595
        %v2144 = vpack.c.b16 %v1600, %v1596
        %v2145 = vpack.c.b16 %v1601, %v1597
        %v2146 = vpack.c.b16 %v1606, %v1602
        %v2147 = vpack.c.b16 %v1607, %v1603
        %v2148 = vpack.c.b16 %v1608, %v1604
        %v2149 = vpack.c.b16 %v1609, %v1605
        %v2150 = vpack.c.b16 %v1614, %v1610
        %v2151 = vpack.c.b16 %v1615, %v1611
        %v2152 = vpack.c.b16 %v1616, %v1612
        %v2153 = vpack.c.b16 %v1617, %v1613
        %v2154 = vpack.c.b16 %v1622, %v1618
        %v2155 = vpack.c.b16 %v1623, %v1619
        %v2156 = vpack.c.b16 %v1624, %v1620
        %v2157 = vpack.c.b16 %v1625, %v1621
        %v2158 = vpack.c.b16 %v1630, %v1626
        %v2159 = vpack.c.b16 %v1631, %v1627
        %v2160 = vpack.c.b16 %v1632, %v1628
        %v2161 = vpack.c.b16 %v1633, %v1629
        %v2162 = vpack.c.b16 %v1638, %v1634
        %v2163 = vpack.c.b16 %v1639, %v1635
        %v2164 = vpack.c.b16 %v1640, %v1636
        %v2165 = vpack.c.b16 %v1641, %v1637
        %v2166 = vpack.c.b16 %v1646, %v1642
        %v2167 = vpack.c.b16 %v1647, %v1643
        %v2168 = vpack.c.b16 %v1648, %v1644
        %v2169 = vpack.c.b16 %v1649, %v1645
        %v2170 = vpack.c.b16 %v1654, %v1650
        %v2171 = vpack.c.b16 %v1655, %v1651
        %v2172 = vpack.c.b16 %v1656, %v1652
        %v2173 = vpack.c.b16 %v1657, %v1653
        %v2174 = vpack.c.b16 %v1662, %v1658
        %v2175 = vpack.c.b16 %v1663, %v1659
        %v2176 = vpack.c.b16 %v1664, %v1660
        %v2177 = vpack.c.b16 %v1665, %v1661
        %v2178 = vpack.c.b16 %v1670, %v1666
        %v2179 = vpack.c.b16 %v1671, %v1667
        %v2180 = vpack.c.b16 %v1672, %v1668
        %v2181 = vpack.c.b16 %v1673, %v1669
        %v2182 = vpack.c.b16 %v1678, %v1674
        %v2183 = vpack.c.b16 %v1679, %v1675
        %v2184 = vpack.c.b16 %v1680, %v1676
        %v2185 = vpack.c.b16 %v1681, %v1677
        %v2186 = vpack.c.b16 %v1686, %v1682
        %v2187 = vpack.c.b16 %v1687, %v1683
        %v2188 = vpack.c.b16 %v1688, %v1684
        %v2189 = vpack.c.b16 %v1689, %v1685
        %v2190 = vpack.c.b16 %v1694, %v1690
        %v2191 = vpack.c.b16 %v1695, %v1691
        %v2192 = vpack.c.b16 %v1696, %v1692
        %v2193 = vpack.c.b16 %v1697, %v1693
        %v2194 = vpack.c.b16 %v1702, %v1698
        %v2195 = vpack.c.b16 %v1703, %v1699
        %v2196 = vpack.c.b16 %v1704, %v1700
        %v2197 = vpack.c.b16 %v1705, %v1701
        %v2198 = vpack.c.b16 %v1710, %v1706
        %v2199 = vpack.c.b16 %v1711, %v1707
        %v2200 = vpack.c.b16 %v1712, %v1708
        %v2201 = vpack.c.b16 %v1713, %v1709
        %v2202 = vpack.c.b16 %v1718, %v1714
        %v2203 = vpack.c.b16 %v1719, %v1715
        %v2204 = vpack.c.b16 %v1720, %v1716
        %v2205 = vpack.c.b16 %v1721, %v1717
        %v2206 = vpack.c.b16 %v1726, %v1722
        %v2207 = vpack.c.b16 %v1727, %v1723
        %v2208 = vpack.c.b16 %v1728, %v1724
        %v2209 = vpack.c.b16 %v1729, %v1725
        %v2210 = vpack.c.b16 %v1734, %v1730
        %v2211 = vpack.c.b16 %v1735, %v1731
        %v2212 = vpack.c.b16 %v1736, %v1732
        %v2213 = vpack.c.b16 %v1737, %v1733
        %v2214 = vpack.c.b16 %v1742, %v1738
        %v2215 = vpack.c.b16 %v1743, %v1739
        %v2216 = vpack.c.b16 %v1744, %v1740
        %v2217 = vpack.c.b16 %v1745, %v1741
        %v2218 = vpack.c.b16 %v1750, %v1746
        %v2219 = vpack.c.b16 %v1751, %v1747
        %v2220 = vpack.c.b16 %v1752, %v1748
        %v2221 = vpack.c.b16 %v1753, %v1749
        %v2222 = vpack.c.b16 %v1758, %v1754
        %v2223 = vpack.c.b16 %v1759, %v1755
        %v2224 = vpack.c.b16 %v1760, %v1756
        %v2225 = vpack.c.b16 %v1761, %v1757
        %v2226 = vpack.c.b16 %v1766, %v1762
        %v2227 = vpack.c.b16 %v1767, %v1763
        %v2228 = vpack.c.b16 %v1768, %v1764
        %v2229 = vpack.c.b16 %v1769, %v1765
        %v2230 = vpack.c.b16 %v1774, %v1770
        %v2231 = vpack.c.b16 %v1775, %v1771
        %v2232 = vpack.c.b16 %v1776, %v1772
        %v2233 = vpack.c.b16 %v1777, %v1773
        %v2234 = vpack.c.b16 %v1782, %v1778
        %v2235 = vpack.c.b16 %v1783, %v1779
        %v2236 = vpack.c.b16 %v1784, %v1780
        %v2237 = vpack.c.b16 %v1785, %v1781
        %v2238 = vpack.c.b16 %v1790, %v1786
        %v2239 = vpack.c.b16 %v1791, %v1787
        %v2240 = vpack.c.b16 %v1792, %v1788
        %v2241 = vpack.c.b16 %v1793, %v1789
        %v2242 = vpack.c.b16 %v1798, %v1794
        %v2243 = vpack.c.b16 %v1799, %v1795
        %v2244 = vpack.c.b16 %v1800, %v1796
        %v2245 = vpack.c.b16 %v1801, %v1797
        %v2246 = vpack.c.b16 %v1806, %v1802
        %v2247 = vpack.c.b16 %v1807, %v1803
        %v2248 = vpack.c.b16 %v1808, %v1804
        %v2249 = vpack.c.b16 %v1809, %v1805
        %v2250 = vpack.c.b16 %v1814, %v1810
        %v2251 = vpack.c.b16 %v1815, %v1811
        %v2252 = vpack.c.b16 %v1816, %v1812
        %v2253 = vpack.c.b16 %v1817, %v1813
        %v2254 = vpack.c.b16 %v1822, %v1818
        %v2255 = vpack.c.b16 %v1823, %v1819
        %v2256 = vpack.c.b16 %v1824, %v1820
        %v2257 = vpack.c.b16 %v1825, %v1821
        %v2258 = vpack.c.b16 %v1830, %v1826
        %v2259 = vpack.c.b16 %v1831, %v1827
        %v2260 = vpack.c.b16 %v1832, %v1828
        %v2261 = vpack.c.b16 %v1833, %v1829
        %v2262 = vpack.c.b16 %v1838, %v1834
        %v2263 = vpack.c.b16 %v1839, %v1835
        %v2264 = vpack.c.b16 %v1840, %v1836
        %v2265 = vpack.c.b16 %v1841, %v1837
        %v2266 = vpack.c.b16 %v1846, %v1842
        %v2267 = vpack.c.b16 %v1847, %v1843
        %v2268 = vpack.c.b16 %v1848, %v1844
        %v2269 = vpack.c.b16 %v1849, %v1845
        %v2270 = vpack.c.b16 %v1854, %v1850
        %v2271 = vpack.c.b16 %v1855, %v1851
        %v2272 = vpack.c.b16 %v1856, %v1852
        %v2273 = vpack.c.b16 %v1857, %v1853
        %v2274 = vpack.c.b16 %v1862, %v1858
        %v2275 = vpack.c.b16 %v1863, %v1859
        %v2276 = vpack.c.b16 %v1864, %v1860
        %v2277 = vpack.c.b16 %v1865, %v1861
        %v2278 = vpack.c.b16 %v1870, %v1866
        %v2279 = vpack.c.b16 %v1871, %v1867
        %v2280 = vpack.c.b16 %v1872, %v1868
        %v2281 = vpack.c.b16 %v1873, %v1869
        %v2282 = vpack.c.b16 %v1878, %v1874
        %v2283 = vpack.c.b16 %v1879, %v1875
        %v2284 = vpack.c.b16 %v1880, %v1876
        %v2285 = vpack.c.b16 %v1881, %v1877
        %v2286 = vpack.c.b16 %v1886, %v1882
        %v2287 = vpack.c.b16 %v1887, %v1883
        %v2288 = vpack.c.b16 %v1888, %v1884
        %v2289 = vpack.c.b16 %v1889, %v1885
        %v2290 = vpack.c.b16 %v1894, %v1890
        %v2291 = vpack.c.b16 %v1895, %v1891
        %v2292 = vpack.c.b16 %v1896, %v1892
        %v2293 = vpack.c.b16 %v1897, %v1893
        %v2294 = vpack.c.b16 %v1902, %v1898
        %v2295 = vpack.c.b16 %v1903, %v1899
        %v2296 = vpack.c.b16 %v1904, %v1900
        %v2297 = vpack.c.b16 %v1905, %v1901
        %v2298 = vpack.c.b16 %v1910, %v1906
        %v2299 = vpack.c.b16 %v1911, %v1907
        %v2300 = vpack.c.b16 %v1912, %v1908
        %v2301 = vpack.c.b16 %v1913, %v1909
        %v2302 = vpack.c.b16 %v1918, %v1914
        %v2303 = vpack.c.b16 %v1919, %v1915
        %v2304 = vpack.c.b16 %v1920, %v1916
        %v2305 = vpack.c.b16 %v1921, %v1917
        %2690 = vmatprep.subr.bf16.mxu0 %v1923
        %2691 = vmatpush1.bf16.msra.mxu0 %v1922
        %2692 = vmatprep.subr.bf16.mxu0 %v1927
        %2693 = vmatpush1.bf16.msra.mxu0 %v1926
        %2694 = vmatprep.subr.bf16.mxu0 %v1931
        %2695 = vmatpush1.bf16.msra.mxu0 %v1930
        %2696 = vmatprep.subr.bf16.mxu0 %v1935
        %2697 = vmatpush1.bf16.msra.mxu0 %v1934
        %2698 = vmatprep.subr.bf16.mxu0 %v1939
        %2699 = vmatpush1.bf16.msra.mxu0 %v1938
        %2700 = vmatprep.subr.bf16.mxu0 %v1943
        %2701 = vmatpush1.bf16.msra.mxu0 %v1942
        %2702 = vmatprep.subr.bf16.mxu0 %v1947
        %2703 = vmatpush1.bf16.msra.mxu0 %v1946
        %2704 = vmatprep.subr.bf16.mxu0 %v1951
        %2705 = vmatpush1.bf16.msra.mxu0 %v1950
        %2706 = vmatprep.subr.bf16.mxu0 %v1955
        %2707 = vmatpush1.bf16.msra.mxu0 %v1954
        %2708 = vmatprep.subr.bf16.mxu0 %v1959
        %2709 = vmatpush1.bf16.msra.mxu0 %v1958
        %2710 = vmatprep.subr.bf16.mxu0 %v1963
        %2711 = vmatpush1.bf16.msra.mxu0 %v1962
        %2712 = vmatprep.subr.bf16.mxu0 %v1967
        %2713 = vmatpush1.bf16.msra.mxu0 %v1966
        %2714 = vmatprep.subr.bf16.mxu0 %v1971
        %2715 = vmatpush1.bf16.msra.mxu0 %v1970
        %2716 = vmatprep.subr.bf16.mxu0 %v1975
        %2717 = vmatpush1.bf16.msra.mxu0 %v1974
        %2718 = vmatprep.subr.bf16.mxu0 %v1979
        %2719 = vmatpush1.bf16.msra.mxu0 %v1978
        %2720 = vmatprep.subr.bf16.mxu0 %v1983
        %2721 = vmatpush1.bf16.msra.mxu0 %v1982
        %2722 = vmatprep.mubr.bf16.mxu0 %v353
        %2723 = vmatmul.mubr.bf16.gmra.mrb[0].mxu0 %v352
        %v2724 = vpop.f32.mrb[0].mxu0
        %v2725 = vadd.f32 %v753, %v2724
        %v2726 = vpop.f32.mrb[0].mxu0
        %v2727 = vadd.f32 %v757, %v2726
        %v2728 = vpop.f32.mrb[0].mxu0
        %v2729 = vpop.f32.mrb[0].mxu0
        %2730 = vdwg.mxu0
        %2731 = vmatprep.subr.bf16.mxu0 %v1987
        %2732 = vmatpush1.bf16.msra.mxu0 %v1986
        %2733 = vmatprep.subr.bf16.mxu0 %v1991
        %2734 = vmatpush1.bf16.msra.mxu0 %v1990
        %2735 = vmatprep.subr.bf16.mxu0 %v1995
        %2736 = vmatpush1.bf16.msra.mxu0 %v1994
        %2737 = vmatprep.subr.bf16.mxu0 %v1999
        %2738 = vmatpush1.bf16.msra.mxu0 %v1998
        %2739 = vmatprep.subr.bf16.mxu0 %v2003
        %2740 = vmatpush1.bf16.msra.mxu0 %v2002
        %2741 = vmatprep.subr.bf16.mxu0 %v2007
        %2742 = vmatpush1.bf16.msra.mxu0 %v2006
        %2743 = vmatprep.subr.bf16.mxu0 %v2011
        %2744 = vmatpush1.bf16.msra.mxu0 %v2010
        %2745 = vmatprep.subr.bf16.mxu0 %v2015
        %2746 = vmatpush1.bf16.msra.mxu0 %v2014
        %2747 = vmatprep.subr.bf16.mxu0 %v2019
        %2748 = vmatpush1.bf16.msra.mxu0 %v2018
        %2749 = vmatprep.subr.bf16.mxu0 %v2023
        %2750 = vmatpush1.bf16.msra.mxu0 %v2022
        %2751 = vmatprep.subr.bf16.mxu0 %v2027
        %2752 = vmatpush1.bf16.msra.mxu0 %v2026
        %2753 = vmatprep.subr.bf16.mxu0 %v2031
        %2754 = vmatpush1.bf16.msra.mxu0 %v2030
        %2755 = vmatprep.subr.bf16.mxu0 %v2035
        %2756 = vmatpush1.bf16.msra.mxu0 %v2034
        %2757 = vmatprep.subr.bf16.mxu0 %v2039
        %2758 = vmatpush1.bf16.msra.mxu0 %v2038
        %2759 = vmatprep.subr.bf16.mxu0 %v2043
        %2760 = vmatpush1.bf16.msra.mxu0 %v2042
        %2761 = vmatprep.subr.bf16.mxu0 %v2047
        %2762 = vmatpush1.bf16.msra.mxu0 %v2046
        %2763 = vmatprep.mubr.bf16.mxu0 %v355
        %2764 = vmatmul.mubr.bf16.gmra.mrb[0].mxu0 %v354
        %v2765 = vpop.f32.mrb[0].mxu0
        %v2766 = vadd.f32 %v2725, %v2765
        %v2767 = vpop.f32.mrb[0].mxu0
        %v2768 = vadd.f32 %v2727, %v2767
        %v2769 = vpop.f32.mrb[0].mxu0
        %v2770 = vpop.f32.mrb[0].mxu0
        %2771 = vdwg.mxu0
        %2772 = vmatprep.subr.bf16.mxu0 %v2051
        %2773 = vmatpush1.bf16.msra.mxu0 %v2050
        %2774 = vmatprep.subr.bf16.mxu0 %v2055
        %2775 = vmatpush1.bf16.msra.mxu0 %v2054
        %2776 = vmatprep.subr.bf16.mxu0 %v2059
        %2777 = vmatpush1.bf16.msra.mxu0 %v2058
        %2778 = vmatprep.subr.bf16.mxu0 %v2063
        %2779 = vmatpush1.bf16.msra.mxu0 %v2062
        %2780 = vmatprep.subr.bf16.mxu0 %v2067
        %2781 = vmatpush1.bf16.msra.mxu0 %v2066
        %2782 = vmatprep.subr.bf16.mxu0 %v2071
        %2783 = vmatpush1.bf16.msra.mxu0 %v2070
        %2784 = vmatprep.subr.bf16.mxu0 %v2075
        %2785 = vmatpush1.bf16.msra.mxu0 %v2074
        %2786 = vmatprep.subr.bf16.mxu0 %v2079
        %2787 = vmatpush1.bf16.msra.mxu0 %v2078
        %2788 = vmatprep.subr.bf16.mxu0 %v2083
        %2789 = vmatpush1.bf16.msra.mxu0 %v2082
        %2790 = vmatprep.subr.bf16.mxu0 %v2087
        %2791 = vmatpush1.bf16.msra.mxu0 %v2086
        %2792 = vmatprep.subr.bf16.mxu0 %v2091
        %2793 = vmatpush1.bf16.msra.mxu0 %v2090
        %2794 = vmatprep.subr.bf16.mxu0 %v2095
        %2795 = vmatpush1.bf16.msra.mxu0 %v2094
        %2796 = vmatprep.subr.bf16.mxu0 %v2099
        %2797 = vmatpush1.bf16.msra.mxu0 %v2098
        %2798 = vmatprep.subr.bf16.mxu0 %v2103
        %2799 = vmatpush1.bf16.msra.mxu0 %v2102
        %2800 = vmatprep.subr.bf16.mxu0 %v2107
        %2801 = vmatpush1.bf16.msra.mxu0 %v2106
        %2802 = vmatprep.subr.bf16.mxu0 %v2111
        %2803 = vmatpush1.bf16.msra.mxu0 %v2110
        %2804 = vmatprep.mubr.bf16.mxu0 %v357
        %2805 = vmatmul.mubr.bf16.gmra.mrb[0].mxu0 %v356
        %v2806 = vpop.f32.mrb[0].mxu0
        %v2807 = vadd.f32 %v2766, %v2806
        %v2808 = vpop.f32.mrb[0].mxu0
        %v2809 = vadd.f32 %v2768, %v2808
        %v2810 = vpop.f32.mrb[0].mxu0
        %v2811 = vpop.f32.mrb[0].mxu0
        %2812 = vdwg.mxu0
        %2813 = vmatprep.subr.bf16.mxu0 %v2115
        %2814 = vmatpush1.bf16.msra.mxu0 %v2114
        %2815 = vmatprep.subr.bf16.mxu0 %v2119
        %2816 = vmatpush1.bf16.msra.mxu0 %v2118
        %2817 = vmatprep.subr.bf16.mxu0 %v2123
        %2818 = vmatpush1.bf16.msra.mxu0 %v2122
        %2819 = vmatprep.subr.bf16.mxu0 %v2127
        %2820 = vmatpush1.bf16.msra.mxu0 %v2126
        %2821 = vmatprep.subr.bf16.mxu0 %v2131
        %2822 = vmatpush1.bf16.msra.mxu0 %v2130
        %2823 = vmatprep.subr.bf16.mxu0 %v2135
        %2824 = vmatpush1.bf16.msra.mxu0 %v2134
        %2825 = vmatprep.subr.bf16.mxu0 %v2139
        %2826 = vmatpush1.bf16.msra.mxu0 %v2138
        %2827 = vmatprep.subr.bf16.mxu0 %v2143
        %2828 = vmatpush1.bf16.msra.mxu0 %v2142
        %2829 = vmatprep.subr.bf16.mxu0 %v2147
        %2830 = vmatpush1.bf16.msra.mxu0 %v2146
        %2831 = vmatprep.subr.bf16.mxu0 %v2151
        %2832 = vmatpush1.bf16.msra.mxu0 %v2150
        %2833 = vmatprep.subr.bf16.mxu0 %v2155
        %2834 = vmatpush1.bf16.msra.mxu0 %v2154
        %2835 = vmatprep.subr.bf16.mxu0 %v2159
        %2836 = vmatpush1.bf16.msra.mxu0 %v2158
        %2837 = vmatprep.subr.bf16.mxu0 %v2163
        %2838 = vmatpush1.bf16.msra.mxu0 %v2162
        %2839 = vmatprep.subr.bf16.mxu0 %v2167
        %2840 = vmatpush1.bf16.msra.mxu0 %v2166
        %2841 = vmatprep.subr.bf16.mxu0 %v2171
        %2842 = vmatpush1.bf16.msra.mxu0 %v2170
        %2843 = vmatprep.subr.bf16.mxu0 %v2175
        %2844 = vmatpush1.bf16.msra.mxu0 %v2174
        %2845 = vmatprep.mubr.bf16.mxu0 %v359
        %2846 = vmatmul.mubr.bf16.gmra.mrb[0].mxu0 %v358
        %v2847 = vpop.f32.mrb[0].mxu0
        %v2848 = vadd.f32 %v2807, %v2847
        %v2849 = vpop.f32.mrb[0].mxu0
        %v2850 = vadd.f32 %v2809, %v2849
        %v2851 = vpop.f32.mrb[0].mxu0
        %v2852 = vpop.f32.mrb[0].mxu0
        %2853 = vdwg.mxu0
        %2854 = vmatprep.subr.bf16.mxu0 %v2179
        %2855 = vmatpush1.bf16.msra.mxu0 %v2178
        %2856 = vmatprep.subr.bf16.mxu0 %v2183
        %2857 = vmatpush1.bf16.msra.mxu0 %v2182
        %2858 = vmatprep.subr.bf16.mxu0 %v2187
        %2859 = vmatpush1.bf16.msra.mxu0 %v2186
        %2860 = vmatprep.subr.bf16.mxu0 %v2191
        %2861 = vmatpush1.bf16.msra.mxu0 %v2190
        %2862 = vmatprep.subr.bf16.mxu0 %v2195
        %2863 = vmatpush1.bf16.msra.mxu0 %v2194
        %2864 = vmatprep.subr.bf16.mxu0 %v2199
        %2865 = vmatpush1.bf16.msra.mxu0 %v2198
        %2866 = vmatprep.subr.bf16.mxu0 %v2203
        %2867 = vmatpush1.bf16.msra.mxu0 %v2202
        %2868 = vmatprep.subr.bf16.mxu0 %v2207
        %2869 = vmatpush1.bf16.msra.mxu0 %v2206
        %2870 = vmatprep.subr.bf16.mxu0 %v2211
        %2871 = vmatpush1.bf16.msra.mxu0 %v2210
        %2872 = vmatprep.subr.bf16.mxu0 %v2215
        %2873 = vmatpush1.bf16.msra.mxu0 %v2214
        %2874 = vmatprep.subr.bf16.mxu0 %v2219
        %2875 = vmatpush1.bf16.msra.mxu0 %v2218
        %2876 = vmatprep.subr.bf16.mxu0 %v2223
        %2877 = vmatpush1.bf16.msra.mxu0 %v2222
        %2878 = vmatprep.subr.bf16.mxu0 %v2227
        %2879 = vmatpush1.bf16.msra.mxu0 %v2226
        %2880 = vmatprep.subr.bf16.mxu0 %v2231
        %2881 = vmatpush1.bf16.msra.mxu0 %v2230
        %2882 = vmatprep.subr.bf16.mxu0 %v2235
        %2883 = vmatpush1.bf16.msra.mxu0 %v2234
        %2884 = vmatprep.subr.bf16.mxu0 %v2239
        %2885 = vmatpush1.bf16.msra.mxu0 %v2238
        %2886 = vmatprep.mubr.bf16.mxu0 %v361
        %2887 = vmatmul.mubr.bf16.gmra.mrb[0].mxu0 %v360
        %v2888 = vpop.f32.mrb[0].mxu0
        %v2889 = vadd.f32 %v2848, %v2888
        %v2890 = vpop.f32.mrb[0].mxu0
        %v2891 = vadd.f32 %v2850, %v2890
        %v2892 = vpop.f32.mrb[0].mxu0
        %v2893 = vpop.f32.mrb[0].mxu0
        %2894 = vdwg.mxu0
        %2895 = vmatprep.subr.bf16.mxu0 %v2243
        %2896 = vmatpush1.bf16.msra.mxu0 %v2242
        %2897 = vmatprep.subr.bf16.mxu0 %v2247
        %2898 = vmatpush1.bf16.msra.mxu0 %v2246
        %2899 = vmatprep.subr.bf16.mxu0 %v2251
        %2900 = vmatpush1.bf16.msra.mxu0 %v2250
        %2901 = vmatprep.subr.bf16.mxu0 %v2255
        %2902 = vmatpush1.bf16.msra.mxu0 %v2254
        %2903 = vmatprep.subr.bf16.mxu0 %v2259
        %2904 = vmatpush1.bf16.msra.mxu0 %v2258
        %2905 = vmatprep.subr.bf16.mxu0 %v2263
        %2906 = vmatpush1.bf16.msra.mxu0 %v2262
        %2907 = vmatprep.subr.bf16.mxu0 %v2267
        %2908 = vmatpush1.bf16.msra.mxu0 %v2266
        %2909 = vmatprep.subr.bf16.mxu0 %v2271
        %2910 = vmatpush1.bf16.msra.mxu0 %v2270
        %2911 = vmatprep.subr.bf16.mxu0 %v2275
        %2912 = vmatpush1.bf16.msra.mxu0 %v2274
        %2913 = vmatprep.subr.bf16.mxu0 %v2279
        %2914 = vmatpush1.bf16.msra.mxu0 %v2278
        %2915 = vmatprep.subr.bf16.mxu0 %v2283
        %2916 = vmatpush1.bf16.msra.mxu0 %v2282
        %2917 = vmatprep.subr.bf16.mxu0 %v2287
        %2918 = vmatpush1.bf16.msra.mxu0 %v2286
        %2919 = vmatprep.subr.bf16.mxu0 %v2291
        %2920 = vmatpush1.bf16.msra.mxu0 %v2290
        %2921 = vmatprep.subr.bf16.mxu0 %v2295
        %2922 = vmatpush1.bf16.msra.mxu0 %v2294
        %2923 = vmatprep.subr.bf16.mxu0 %v2299
        %2924 = vmatpush1.bf16.msra.mxu0 %v2298
        %2925 = vmatprep.subr.bf16.mxu0 %v2303
        %2926 = vmatpush1.bf16.msra.mxu0 %v2302
        %2927 = vmatprep.mubr.bf16.mxu0 %v363
        %2928 = vmatmul.mubr.bf16.gmra.mrb[0].mxu0 %v362
        %v2929 = vpop.f32.mrb[0].mxu0
        %v2930 = vadd.f32 %v2889, %v2929
        %v2931 = vpop.f32.mrb[0].mxu0
        %v2932 = vadd.f32 %v2891, %v2931
        %v2933 = vpop.f32.mrb[0].mxu0
        %v2934 = vpop.f32.mrb[0].mxu0
        %2935 = vdwg.mxu0
        %2936 = vmatprep.subr.bf16.mxu0 %v1925
        %2937 = vmatpush1.bf16.msra.mxu0 %v1924
        %2938 = vmatprep.subr.bf16.mxu0 %v1929
        %2939 = vmatpush1.bf16.msra.mxu0 %v1928
        %2940 = vmatprep.subr.bf16.mxu0 %v1933
        %2941 = vmatpush1.bf16.msra.mxu0 %v1932
        %2942 = vmatprep.subr.bf16.mxu0 %v1937
        %2943 = vmatpush1.bf16.msra.mxu0 %v1936
        %2944 = vmatprep.subr.bf16.mxu0 %v1941
        %2945 = vmatpush1.bf16.msra.mxu0 %v1940
        %2946 = vmatprep.subr.bf16.mxu0 %v1945
        %2947 = vmatpush1.bf16.msra.mxu0 %v1944
        %2948 = vmatprep.subr.bf16.mxu0 %v1949
        %2949 = vmatpush1.bf16.msra.mxu0 %v1948
        %2950 = vmatprep.subr.bf16.mxu0 %v1953
        %2951 = vmatpush1.bf16.msra.mxu0 %v1952
        %2952 = vmatprep.subr.bf16.mxu0 %v1957
        %2953 = vmatpush1.bf16.msra.mxu0 %v1956
        %2954 = vmatprep.subr.bf16.mxu0 %v1961
        %2955 = vmatpush1.bf16.msra.mxu0 %v1960
        %2956 = vmatprep.subr.bf16.mxu0 %v1965
        %2957 = vmatpush1.bf16.msra.mxu0 %v1964
        %2958 = vmatprep.subr.bf16.mxu0 %v1969
        %2959 = vmatpush1.bf16.msra.mxu0 %v1968
        %2960 = vmatprep.subr.bf16.mxu0 %v1973
        %2961 = vmatpush1.bf16.msra.mxu0 %v1972
        %2962 = vmatprep.subr.bf16.mxu0 %v1977
        %2963 = vmatpush1.bf16.msra.mxu0 %v1976
        %2964 = vmatprep.subr.bf16.mxu0 %v1981
        %2965 = vmatpush1.bf16.msra.mxu0 %v1980
        %2966 = vmatprep.subr.bf16.mxu0 %v1985
        %2967 = vmatpush1.bf16.msra.mxu0 %v1984
        %2968 = vmatprep.mubr.bf16.mxu0 %v353
        %2969 = vmatmul.mubr.bf16.gmra.mrb[0].mxu0 %v352
        %v2970 = vpop.f32.mrb[0].mxu0
        %v2971 = vadd.f32 %v761, %v2970
        %v2972 = vpop.f32.mrb[0].mxu0
        %v2973 = vadd.f32 %v765, %v2972
        %v2974 = vpop.f32.mrb[0].mxu0
        %v2975 = vpop.f32.mrb[0].mxu0
        %2976 = vdwg.mxu0
        %2977 = vmatprep.subr.bf16.mxu0 %v1989
        %2978 = vmatpush1.bf16.msra.mxu0 %v1988
        %2979 = vmatprep.subr.bf16.mxu0 %v1993
        %2980 = vmatpush1.bf16.msra.mxu0 %v1992
        %2981 = vmatprep.subr.bf16.mxu0 %v1997
        %2982 = vmatpush1.bf16.msra.mxu0 %v1996
        %2983 = vmatprep.subr.bf16.mxu0 %v2001
        %2984 = vmatpush1.bf16.msra.mxu0 %v2000
        %2985 = vmatprep.subr.bf16.mxu0 %v2005
        %2986 = vmatpush1.bf16.msra.mxu0 %v2004
        %2987 = vmatprep.subr.bf16.mxu0 %v2009
        %2988 = vmatpush1.bf16.msra.mxu0 %v2008
        %2989 = vmatprep.subr.bf16.mxu0 %v2013
        %2990 = vmatpush1.bf16.msra.mxu0 %v2012
        %2991 = vmatprep.subr.bf16.mxu0 %v2017
        %2992 = vmatpush1.bf16.msra.mxu0 %v2016
        %2993 = vmatprep.subr.bf16.mxu0 %v2021
        %2994 = vmatpush1.bf16.msra.mxu0 %v2020
        %2995 = vmatprep.subr.bf16.mxu0 %v2025
        %2996 = vmatpush1.bf16.msra.mxu0 %v2024
        %2997 = vmatprep.subr.bf16.mxu0 %v2029
        %2998 = vmatpush1.bf16.msra.mxu0 %v2028
        %2999 = vmatprep.subr.bf16.mxu0 %v2033
        %3000 = vmatpush1.bf16.msra.mxu0 %v2032
        %3001 = vmatprep.subr.bf16.mxu0 %v2037
        %3002 = vmatpush1.bf16.msra.mxu0 %v2036
        %3003 = vmatprep.subr.bf16.mxu0 %v2041
        %3004 = vmatpush1.bf16.msra.mxu0 %v2040
        %3005 = vmatprep.subr.bf16.mxu0 %v2045
        %3006 = vmatpush1.bf16.msra.mxu0 %v2044
        %3007 = vmatprep.subr.bf16.mxu0 %v2049
        %3008 = vmatpush1.bf16.msra.mxu0 %v2048
        %3009 = vmatprep.mubr.bf16.mxu0 %v355
        %3010 = vmatmul.mubr.bf16.gmra.mrb[0].mxu0 %v354
        %v3011 = vpop.f32.mrb[0].mxu0
        %v3012 = vadd.f32 %v2971, %v3011
        %v3013 = vpop.f32.mrb[0].mxu0
        %v3014 = vadd.f32 %v2973, %v3013
        %v3015 = vpop.f32.mrb[0].mxu0
        %v3016 = vpop.f32.mrb[0].mxu0
        %3017 = vdwg.mxu0
        %3018 = vmatprep.subr.bf16.mxu0 %v2053
        %3019 = vmatpush1.bf16.msra.mxu0 %v2052
        %3020 = vmatprep.subr.bf16.mxu0 %v2057
        %3021 = vmatpush1.bf16.msra.mxu0 %v2056
        %3022 = vmatprep.subr.bf16.mxu0 %v2061
        %3023 = vmatpush1.bf16.msra.mxu0 %v2060
        %3024 = vmatprep.subr.bf16.mxu0 %v2065
        %3025 = vmatpush1.bf16.msra.mxu0 %v2064
        %3026 = vmatprep.subr.bf16.mxu0 %v2069
        %3027 = vmatpush1.bf16.msra.mxu0 %v2068
        %3028 = vmatprep.subr.bf16.mxu0 %v2073
        %3029 = vmatpush1.bf16.msra.mxu0 %v2072
        %3030 = vmatprep.subr.bf16.mxu0 %v2077
        %3031 = vmatpush1.bf16.msra.mxu0 %v2076
        %3032 = vmatprep.subr.bf16.mxu0 %v2081
        %3033 = vmatpush1.bf16.msra.mxu0 %v2080
        %3034 = vmatprep.subr.bf16.mxu0 %v2085
        %3035 = vmatpush1.bf16.msra.mxu0 %v2084
        %3036 = vmatprep.subr.bf16.mxu0 %v2089
        %3037 = vmatpush1.bf16.msra.mxu0 %v2088
        %3038 = vmatprep.subr.bf16.mxu0 %v2093
        %3039 = vmatpush1.bf16.msra.mxu0 %v2092
        %3040 = vmatprep.subr.bf16.mxu0 %v2097
        %3041 = vmatpush1.bf16.msra.mxu0 %v2096
        %3042 = vmatprep.subr.bf16.mxu0 %v2101
        %3043 = vmatpush1.bf16.msra.mxu0 %v2100
        %3044 = vmatprep.subr.bf16.mxu0 %v2105
        %3045 = vmatpush1.bf16.msra.mxu0 %v2104
        %3046 = vmatprep.subr.bf16.mxu0 %v2109
        %3047 = vmatpush1.bf16.msra.mxu0 %v2108
        %3048 = vmatprep.subr.bf16.mxu0 %v2113
        %3049 = vmatpush1.bf16.msra.mxu0 %v2112
        %3050 = vmatprep.mubr.bf16.mxu0 %v357
        %3051 = vmatmul.mubr.bf16.gmra.mrb[0].mxu0 %v356
        %v3052 = vpop.f32.mrb[0].mxu0
        %v3053 = vadd.f32 %v3012, %v3052
        %v3054 = vpop.f32.mrb[0].mxu0
        %v3055 = vadd.f32 %v3014, %v3054
        %v3056 = vpop.f32.mrb[0].mxu0
        %v3057 = vpop.f32.mrb[0].mxu0
        %3058 = vdwg.mxu0
        %3059 = vmatprep.subr.bf16.mxu0 %v2117
        %3060 = vmatpush1.bf16.msra.mxu0 %v2116
        %3061 = vmatprep.subr.bf16.mxu0 %v2121
        %3062 = vmatpush1.bf16.msra.mxu0 %v2120
        %3063 = vmatprep.subr.bf16.mxu0 %v2125
        %3064 = vmatpush1.bf16.msra.mxu0 %v2124
        %3065 = vmatprep.subr.bf16.mxu0 %v2129
        %3066 = vmatpush1.bf16.msra.mxu0 %v2128
        %3067 = vmatprep.subr.bf16.mxu0 %v2133
        %3068 = vmatpush1.bf16.msra.mxu0 %v2132
        %3069 = vmatprep.subr.bf16.mxu0 %v2137
        %3070 = vmatpush1.bf16.msra.mxu0 %v2136
        %3071 = vmatprep.subr.bf16.mxu0 %v2141
        %3072 = vmatpush1.bf16.msra.mxu0 %v2140
        %3073 = vmatprep.subr.bf16.mxu0 %v2145
        %3074 = vmatpush1.bf16.msra.mxu0 %v2144
        %3075 = vmatprep.subr.bf16.mxu0 %v2149
        %3076 = vmatpush1.bf16.msra.mxu0 %v2148
        %3077 = vmatprep.subr.bf16.mxu0 %v2153
        %3078 = vmatpush1.bf16.msra.mxu0 %v2152
        %3079 = vmatprep.subr.bf16.mxu0 %v2157
        %3080 = vmatpush1.bf16.msra.mxu0 %v2156
        %3081 = vmatprep.subr.bf16.mxu0 %v2161
        %3082 = vmatpush1.bf16.msra.mxu0 %v2160
        %3083 = vmatprep.subr.bf16.mxu0 %v2165
        %3084 = vmatpush1.bf16.msra.mxu0 %v2164
        %3085 = vmatprep.subr.bf16.mxu0 %v2169
        %3086 = vmatpush1.bf16.msra.mxu0 %v2168
        %3087 = vmatprep.subr.bf16.mxu0 %v2173
        %3088 = vmatpush1.bf16.msra.mxu0 %v2172
        %3089 = vmatprep.subr.bf16.mxu0 %v2177
        %3090 = vmatpush1.bf16.msra.mxu0 %v2176
        %3091 = vmatprep.mubr.bf16.mxu0 %v359
        %3092 = vmatmul.mubr.bf16.gmra.mrb[0].mxu0 %v358
        %v3093 = vpop.f32.mrb[0].mxu0
        %v3094 = vadd.f32 %v3053, %v3093
        %v3095 = vpop.f32.mrb[0].mxu0
        %v3096 = vadd.f32 %v3055, %v3095
        %v3097 = vpop.f32.mrb[0].mxu0
        %v3098 = vpop.f32.mrb[0].mxu0
        %3099 = vdwg.mxu0
        %3100 = vmatprep.subr.bf16.mxu0 %v2181
        %3101 = vmatpush1.bf16.msra.mxu0 %v2180
        %3102 = vmatprep.subr.bf16.mxu0 %v2185
        %3103 = vmatpush1.bf16.msra.mxu0 %v2184
        %3104 = vmatprep.subr.bf16.mxu0 %v2189
        %3105 = vmatpush1.bf16.msra.mxu0 %v2188
        %3106 = vmatprep.subr.bf16.mxu0 %v2193
        %3107 = vmatpush1.bf16.msra.mxu0 %v2192
        %3108 = vmatprep.subr.bf16.mxu0 %v2197
        %3109 = vmatpush1.bf16.msra.mxu0 %v2196
        %3110 = vmatprep.subr.bf16.mxu0 %v2201
        %3111 = vmatpush1.bf16.msra.mxu0 %v2200
        %3112 = vmatprep.subr.bf16.mxu0 %v2205
        %3113 = vmatpush1.bf16.msra.mxu0 %v2204
        %3114 = vmatprep.subr.bf16.mxu0 %v2209
        %3115 = vmatpush1.bf16.msra.mxu0 %v2208
        %3116 = vmatprep.subr.bf16.mxu0 %v2213
        %3117 = vmatpush1.bf16.msra.mxu0 %v2212
        %3118 = vmatprep.subr.bf16.mxu0 %v2217
        %3119 = vmatpush1.bf16.msra.mxu0 %v2216
        %3120 = vmatprep.subr.bf16.mxu0 %v2221
        %3121 = vmatpush1.bf16.msra.mxu0 %v2220
        %3122 = vmatprep.subr.bf16.mxu0 %v2225
        %3123 = vmatpush1.bf16.msra.mxu0 %v2224
        %3124 = vmatprep.subr.bf16.mxu0 %v2229
        %3125 = vmatpush1.bf16.msra.mxu0 %v2228
        %3126 = vmatprep.subr.bf16.mxu0 %v2233
        %3127 = vmatpush1.bf16.msra.mxu0 %v2232
        %3128 = vmatprep.subr.bf16.mxu0 %v2237
        %3129 = vmatpush1.bf16.msra.mxu0 %v2236
        %3130 = vmatprep.subr.bf16.mxu0 %v2241
        %3131 = vmatpush1.bf16.msra.mxu0 %v2240
        %3132 = vmatprep.mubr.bf16.mxu0 %v361
        %3133 = vmatmul.mubr.bf16.gmra.mrb[0].mxu0 %v360
        %v3134 = vpop.f32.mrb[0].mxu0
        %v3135 = vadd.f32 %v3094, %v3134
        %v3136 = vpop.f32.mrb[0].mxu0
        %v3137 = vadd.f32 %v3096, %v3136
        %v3138 = vpop.f32.mrb[0].mxu0
        %v3139 = vpop.f32.mrb[0].mxu0
        %3140 = vdwg.mxu0
        %3141 = vmatprep.subr.bf16.mxu0 %v2245
        %3142 = vmatpush1.bf16.msra.mxu0 %v2244
        %3143 = vmatprep.subr.bf16.mxu0 %v2249
        %3144 = vmatpush1.bf16.msra.mxu0 %v2248
        %3145 = vmatprep.subr.bf16.mxu0 %v2253
        %3146 = vmatpush1.bf16.msra.mxu0 %v2252
        %3147 = vmatprep.subr.bf16.mxu0 %v2257
        %3148 = vmatpush1.bf16.msra.mxu0 %v2256
        %3149 = vmatprep.subr.bf16.mxu0 %v2261
        %3150 = vmatpush1.bf16.msra.mxu0 %v2260
        %3151 = vmatprep.subr.bf16.mxu0 %v2265
        %3152 = vmatpush1.bf16.msra.mxu0 %v2264
        %3153 = vmatprep.subr.bf16.mxu0 %v2269
        %3154 = vmatpush1.bf16.msra.mxu0 %v2268
        %3155 = vmatprep.subr.bf16.mxu0 %v2273
        %3156 = vmatpush1.bf16.msra.mxu0 %v2272
        %3157 = vmatprep.subr.bf16.mxu0 %v2277
        %3158 = vmatpush1.bf16.msra.mxu0 %v2276
        %3159 = vmatprep.subr.bf16.mxu0 %v2281
        %3160 = vmatpush1.bf16.msra.mxu0 %v2280
        %3161 = vmatprep.subr.bf16.mxu0 %v2285
        %3162 = vmatpush1.bf16.msra.mxu0 %v2284
        %3163 = vmatprep.subr.bf16.mxu0 %v2289
        %3164 = vmatpush1.bf16.msra.mxu0 %v2288
        %3165 = vmatprep.subr.bf16.mxu0 %v2293
        %3166 = vmatpush1.bf16.msra.mxu0 %v2292
        %3167 = vmatprep.subr.bf16.mxu0 %v2297
        %3168 = vmatpush1.bf16.msra.mxu0 %v2296
        %3169 = vmatprep.subr.bf16.mxu0 %v2301
        %3170 = vmatpush1.bf16.msra.mxu0 %v2300
        %3171 = vmatprep.subr.bf16.mxu0 %v2305
        %3172 = vmatpush1.bf16.msra.mxu0 %v2304
        %3173 = vmatprep.mubr.bf16.mxu0 %v363
        %3174 = vmatmul.mubr.bf16.gmra.mrb[0].mxu0 %v362
        %v3175 = vpop.f32.mrb[0].mxu0
        %v3176 = vadd.f32 %v3135, %v3175
        %v3177 = vpop.f32.mrb[0].mxu0
        %v3178 = vadd.f32 %v3137, %v3177
        %v3179 = vpop.f32.mrb[0].mxu0
        %v3180 = vpop.f32.mrb[0].mxu0
        %3181 = vdwg.mxu0
        %v3182 = vmax.f32 %v2930, 0.0
        %v3183 = vmax.f32 %v2932, 0.0
        %v3184 = vmax.f32 %v3176, 0.0
        %v3185 = vmax.f32 %v3178, 0.0
        %v3186 = vld [vmem:[#allocation11] sm:$0xff]
        %v3187 = vpack.c.bf16 %v3182, %v3182
        %v3188 = vpack.c.bf16 %v3183, %v3183
        %v3189 = vpack.c.bf16 %v3184, %v3184
        %v3190 = vpack.c.bf16 %v3185, %v3185
        %v3191 = vld [vmem:[%s295] sm:$0xf]
        %v3192 = vld [vmem:[%s295 + $0x4] sm:$0xf]
        %v3193 = vld [vmem:[%s295 + $0x8] sm:$0xf]
        %v3194 = vld [vmem:[%s295 + $0xc] sm:$0xf]
        %v3195 = vld [vmem:[%s295 + $0x10] sm:$0xf]
        %v3196 = vld [vmem:[%s295 + $0x14] sm:$0xf]
        %v3197 = vld [vmem:[%s295 + $0x18] sm:$0xf]
        %v3198 = vld [vmem:[%s295 + $0x1c] sm:$0xf]
        %v3199 = vld [vmem:[%s295 + $0x20] sm:$0xf]
        %v3200 = vld [vmem:[%s295 + $0x24] sm:$0xf]
        %v3201 = vld [vmem:[%s295 + $0x28] sm:$0xf]
        %v3202 = vld [vmem:[%s295 + $0x2c] sm:$0xf]
        %v3203 = vld [vmem:[%s295 + $0x30] sm:$0xf]
        %v3204 = vld [vmem:[%s295 + $0x34] sm:$0xf]
        %v3205 = vld [vmem:[%s295 + $0x38] sm:$0xf]
        %v3206 = vld [vmem:[%s295 + $0x3c] sm:$0xf]
        %v3207 = vld [vmem:[%s295 + $0x40] sm:$0xf]
        %v3208 = vld [vmem:[%s295 + $0x44] sm:$0xf]
        %v3209 = vld [vmem:[%s295 + $0x48] sm:$0xf]
        %v3210 = vld [vmem:[%s295 + $0x4c] sm:$0xf]
        %v3211 = vld [vmem:[%s295 + $0x50] sm:$0xf]
        %v3212 = vld [vmem:[%s295 + $0x54] sm:$0xf]
        %v3213 = vld [vmem:[%s295 + $0x58] sm:$0xf]
        %v3214 = vld [vmem:[%s295 + $0x5c] sm:$0xf]
        %v3215 = vld [vmem:[%s295 + $0x60] sm:$0xf]
        %v3216 = vld [vmem:[%s295 + $0x64] sm:$0xf]
        %v3217 = vld [vmem:[%s295 + $0x68] sm:$0xf]
        %v3218 = vld [vmem:[%s295 + $0x6c] sm:$0xf]
        %v3219 = vld [vmem:[%s295 + $0x70] sm:$0xf]
        %v3220 = vld [vmem:[%s295 + $0x74] sm:$0xf]
        %v3221 = vld [vmem:[%s295 + $0x78] sm:$0xf]
        %v3222 = vld [vmem:[%s295 + $0x7c] sm:$0xf]
        %v3223 = vld [vmem:[%s295 + $0x80] sm:$0xf]
        %v3224 = vld [vmem:[%s295 + $0x84] sm:$0xf]
        %v3225 = vld [vmem:[%s295 + $0x88] sm:$0xf]
        %v3226 = vld [vmem:[%s295 + $0x8c] sm:$0xf]
        %v3227 = vld [vmem:[%s295 + $0x90] sm:$0xf]
        %v3228 = vld [vmem:[%s295 + $0x94] sm:$0xf]
        %v3229 = vld [vmem:[%s295 + $0x98] sm:$0xf]
        %v3230 = vld [vmem:[%s295 + $0x9c] sm:$0xf]
        %v3231 = vld [vmem:[%s295 + $0xa0] sm:$0xf]
        %v3232 = vld [vmem:[%s295 + $0xa4] sm:$0xf]
        %v3233 = vld [vmem:[%s295 + $0xa8] sm:$0xf]
        %v3234 = vld [vmem:[%s295 + $0xac] sm:$0xf]
        %v3235 = vld [vmem:[%s295 + $0xb0] sm:$0xf]
        %v3236 = vld [vmem:[%s295 + $0xb4] sm:$0xf]
        %v3237 = vld [vmem:[%s295 + $0xb8] sm:$0xf]
        %v3238 = vld [vmem:[%s295 + $0xbc] sm:$0xf]
        %v3239 = vld [vmem:[%s295 + $0xc0] sm:$0xf]
        %v3240 = vld [vmem:[%s295 + $0xc4] sm:$0xf]
        %v3241 = vld [vmem:[%s295 + $0xc8] sm:$0xf]
        %v3242 = vld [vmem:[%s295 + $0xcc] sm:$0xf]
        %v3243 = vld [vmem:[%s295 + $0xd0] sm:$0xf]
        %v3244 = vld [vmem:[%s295 + $0xd4] sm:$0xf]
        %v3245 = vld [vmem:[%s295 + $0xd8] sm:$0xf]
        %v3246 = vld [vmem:[%s295 + $0xdc] sm:$0xf]
        %v3247 = vld [vmem:[%s295 + $0xe0] sm:$0xf]
        %v3248 = vld [vmem:[%s295 + $0xe4] sm:$0xf]
        %v3249 = vld [vmem:[%s295 + $0xe8] sm:$0xf]
        %v3250 = vld [vmem:[%s295 + $0xec] sm:$0xf]
        %v3251 = vld [vmem:[%s295 + $0xf0] sm:$0xf]
        %v3252 = vld [vmem:[%s295 + $0xf4] sm:$0xf]
        %v3253 = vld [vmem:[%s295 + $0xf8] sm:$0xf]
        %v3254 = vld [vmem:[%s295 + $0xfc] sm:$0xf]
        %v3319 = vunpack.c.l.b16 %v3191
        %v3320 = vunpack.c.l.b16 %v3192
        %v3321 = vunpack.c.l.b16 %v3193
        %v3322 = vunpack.c.l.b16 %v3194
        %v3323 = vunpack.c.l.b16 %v3195
        %v3324 = vunpack.c.l.b16 %v3196
        %v3325 = vunpack.c.l.b16 %v3197
        %v3326 = vunpack.c.l.b16 %v3198
        %v3327 = vunpack.c.l.b16 %v3199
        %v3328 = vunpack.c.l.b16 %v3200
        %v3329 = vunpack.c.l.b16 %v3201
        %v3330 = vunpack.c.l.b16 %v3202
        %v3331 = vunpack.c.l.b16 %v3203
        %v3332 = vunpack.c.l.b16 %v3204
        %v3333 = vunpack.c.l.b16 %v3205
        %v3334 = vunpack.c.l.b16 %v3206
        %v3335 = vunpack.c.l.b16 %v3207
        %v3336 = vunpack.c.l.b16 %v3208
        %v3337 = vunpack.c.l.b16 %v3209
        %v3338 = vunpack.c.l.b16 %v3210
        %v3339 = vunpack.c.l.b16 %v3211
        %v3340 = vunpack.c.l.b16 %v3212
        %v3341 = vunpack.c.l.b16 %v3213
        %v3342 = vunpack.c.l.b16 %v3214
        %v3343 = vunpack.c.l.b16 %v3215
        %v3344 = vunpack.c.l.b16 %v3216
        %v3345 = vunpack.c.l.b16 %v3217
        %v3346 = vunpack.c.l.b16 %v3218
        %v3347 = vunpack.c.l.b16 %v3219
        %v3348 = vunpack.c.l.b16 %v3220
        %v3349 = vunpack.c.l.b16 %v3221
        %v3350 = vunpack.c.l.b16 %v3222
        %v3351 = vunpack.c.l.b16 %v3223
        %v3352 = vunpack.c.l.b16 %v3224
        %v3353 = vunpack.c.l.b16 %v3225
        %v3354 = vunpack.c.l.b16 %v3226
        %v3355 = vunpack.c.l.b16 %v3227
        %v3356 = vunpack.c.l.b16 %v3228
        %v3357 = vunpack.c.l.b16 %v3229
        %v3358 = vunpack.c.l.b16 %v3230
        %v3359 = vunpack.c.l.b16 %v3231
        %v3360 = vunpack.c.l.b16 %v3232
        %v3361 = vunpack.c.l.b16 %v3233
        %v3362 = vunpack.c.l.b16 %v3234
        %v3363 = vunpack.c.l.b16 %v3235
        %v3364 = vunpack.c.l.b16 %v3236
        %v3365 = vunpack.c.l.b16 %v3237
        %v3366 = vunpack.c.l.b16 %v3238
        %v3367 = vunpack.c.l.b16 %v3239
        %v3368 = vunpack.c.l.b16 %v3240
        %v3369 = vunpack.c.l.b16 %v3241
        %v3370 = vunpack.c.l.b16 %v3242
        %v3371 = vunpack.c.l.b16 %v3243
        %v3372 = vunpack.c.l.b16 %v3244
        %v3373 = vunpack.c.l.b16 %v3245
        %v3374 = vunpack.c.l.b16 %v3246
        %v3375 = vunpack.c.l.b16 %v3247
        %v3376 = vunpack.c.l.b16 %v3248
        %v3377 = vunpack.c.l.b16 %v3249
        %v3378 = vunpack.c.l.b16 %v3250
        %v3379 = vunpack.c.l.b16 %v3251
        %v3380 = vunpack.c.l.b16 %v3252
        %v3381 = vunpack.c.l.b16 %v3253
        %v3382 = vunpack.c.l.b16 %v3254
        %v3383 = vpack.c.b16 %v3320, %v3319
        %v3384 = vpack.c.b16 %v3322, %v3321
        %v3385 = vpack.c.b16 %v3324, %v3323
        %v3386 = vpack.c.b16 %v3326, %v3325
        %v3387 = vpack.c.b16 %v3328, %v3327
        %v3388 = vpack.c.b16 %v3330, %v3329
        %v3389 = vpack.c.b16 %v3332, %v3331
        %v3390 = vpack.c.b16 %v3334, %v3333
        %v3391 = vpack.c.b16 %v3336, %v3335
        %v3392 = vpack.c.b16 %v3338, %v3337
        %v3393 = vpack.c.b16 %v3340, %v3339
        %v3394 = vpack.c.b16 %v3342, %v3341
        %v3395 = vpack.c.b16 %v3344, %v3343
        %v3396 = vpack.c.b16 %v3346, %v3345
        %v3397 = vpack.c.b16 %v3348, %v3347
        %v3398 = vpack.c.b16 %v3350, %v3349
        %v3399 = vpack.c.b16 %v3352, %v3351
        %v3400 = vpack.c.b16 %v3354, %v3353
        %v3401 = vpack.c.b16 %v3356, %v3355
        %v3402 = vpack.c.b16 %v3358, %v3357
        %v3403 = vpack.c.b16 %v3360, %v3359
        %v3404 = vpack.c.b16 %v3362, %v3361
        %v3405 = vpack.c.b16 %v3364, %v3363
        %v3406 = vpack.c.b16 %v3366, %v3365
        %v3407 = vpack.c.b16 %v3368, %v3367
        %v3408 = vpack.c.b16 %v3370, %v3369
        %v3409 = vpack.c.b16 %v3372, %v3371
        %v3410 = vpack.c.b16 %v3374, %v3373
        %v3411 = vpack.c.b16 %v3376, %v3375
        %v3412 = vpack.c.b16 %v3378, %v3377
        %v3413 = vpack.c.b16 %v3380, %v3379
        %v3414 = vpack.c.b16 %v3382, %v3381
        %3447 = vmatprep.subr.bf16.mxu0 0
        %3448 = vmatpush1.bf16.msra.mxu0 %v3383
        %3449 = vmatprep.subr.bf16.mxu0 0
        %3450 = vmatpush1.bf16.msra.mxu0 %v3384
        %3451 = vmatprep.subr.bf16.mxu0 0
        %3452 = vmatpush1.bf16.msra.mxu0 %v3385
        %3453 = vmatprep.subr.bf16.mxu0 0
        %3454 = vmatpush1.bf16.msra.mxu0 %v3386
        %3455 = vmatprep.subr.bf16.mxu0 0
        %3456 = vmatpush1.bf16.msra.mxu0 %v3387
        %3457 = vmatprep.subr.bf16.mxu0 0
        %3458 = vmatpush1.bf16.msra.mxu0 %v3388
        %3459 = vmatprep.subr.bf16.mxu0 0
        %3460 = vmatpush1.bf16.msra.mxu0 %v3389
        %3461 = vmatprep.subr.bf16.mxu0 0
        %3462 = vmatpush1.bf16.msra.mxu0 %v3390
        %3463 = vmatprep.subr.bf16.mxu0 0
        %3464 = vmatpush1.bf16.msra.mxu0 %v3391
        %3465 = vmatprep.subr.bf16.mxu0 0
        %3466 = vmatpush1.bf16.msra.mxu0 %v3392
        %3467 = vmatprep.subr.bf16.mxu0 0
        %3468 = vmatpush1.bf16.msra.mxu0 %v3393
        %3469 = vmatprep.subr.bf16.mxu0 0
        %3470 = vmatpush1.bf16.msra.mxu0 %v3394
        %3471 = vmatprep.subr.bf16.mxu0 0
        %3472 = vmatpush1.bf16.msra.mxu0 %v3395
        %3473 = vmatprep.subr.bf16.mxu0 0
        %3474 = vmatpush1.bf16.msra.mxu0 %v3396
        %3475 = vmatprep.subr.bf16.mxu0 0
        %3476 = vmatpush1.bf16.msra.mxu0 %v3397
        %3477 = vmatprep.subr.bf16.mxu0 0
        %3478 = vmatpush1.bf16.msra.mxu0 %v3398
        %3479 = vmatprep.mubr.bf16.mxu0 %v3188
        %3480 = vmatmul.mubr.bf16.gmra.mrb[0].mxu0 %v3187
        %v3481 = vpop.f32.mrb[0].mxu0
        %v3482 = vadd.f32 0.0, %v3481
        %v3483 = vpop.f32.mrb[0].mxu0
        %v3484 = vpop.f32.mrb[0].mxu0
        %v3485 = vpop.f32.mrb[0].mxu0
        %3486 = vdwg.mxu0
        %3487 = vmatprep.subr.bf16.mxu0 0
        %3488 = vmatpush1.bf16.msra.mxu0 %v3399
        %3489 = vmatprep.subr.bf16.mxu0 0
        %3490 = vmatpush1.bf16.msra.mxu0 %v3400
        %3491 = vmatprep.subr.bf16.mxu0 0
        %3492 = vmatpush1.bf16.msra.mxu0 %v3401
        %3493 = vmatprep.subr.bf16.mxu0 0
        %3494 = vmatpush1.bf16.msra.mxu0 %v3402
        %3495 = vmatprep.subr.bf16.mxu0 0
        %3496 = vmatpush1.bf16.msra.mxu0 %v3403
        %3497 = vmatprep.subr.bf16.mxu0 0
        %3498 = vmatpush1.bf16.msra.mxu0 %v3404
        %3499 = vmatprep.subr.bf16.mxu0 0
        %3500 = vmatpush1.bf16.msra.mxu0 %v3405
        %3501 = vmatprep.subr.bf16.mxu0 0
        %3502 = vmatpush1.bf16.msra.mxu0 %v3406
        %3503 = vmatprep.subr.bf16.mxu0 0
        %3504 = vmatpush1.bf16.msra.mxu0 %v3407
        %3505 = vmatprep.subr.bf16.mxu0 0
        %3506 = vmatpush1.bf16.msra.mxu0 %v3408
        %3507 = vmatprep.subr.bf16.mxu0 0
        %3508 = vmatpush1.bf16.msra.mxu0 %v3409
        %3509 = vmatprep.subr.bf16.mxu0 0
        %3510 = vmatpush1.bf16.msra.mxu0 %v3410
        %3511 = vmatprep.subr.bf16.mxu0 0
        %3512 = vmatpush1.bf16.msra.mxu0 %v3411
        %3513 = vmatprep.subr.bf16.mxu0 0
        %3514 = vmatpush1.bf16.msra.mxu0 %v3412
        %3515 = vmatprep.subr.bf16.mxu0 0
        %3516 = vmatpush1.bf16.msra.mxu0 %v3413
        %3517 = vmatprep.subr.bf16.mxu0 0
        %3518 = vmatpush1.bf16.msra.mxu0 %v3414
        %3519 = vmatprep.mubr.bf16.mxu0 %v3190
        %3520 = vmatmul.mubr.bf16.gmra.mrb[0].mxu0 %v3189
        %v3521 = vpop.f32.mrb[0].mxu0
        %v3522 = vadd.f32 %v3482, %v3521
        %v3523 = vpop.f32.mrb[0].mxu0
        %v3524 = vpop.f32.mrb[0].mxu0
        %v3525 = vpop.f32.mrb[0].mxu0
        %3526 = vdwg.mxu0
        %v3527 = vadd.f32 %v3186, %v3522
        %3528 = vst [vmem:[#allocation11] sm:$0xff] %v3527
        %p3529 = scmp.eq.s32.totalorder %s24, 1
        // Predicated region
        $region65: #{tpu_custom_call.1} parent=39 // pred_check
          %p3530 = pneg %p3529
        $region66: #{tpu_custom_call.1} parent=39 // pred_check_branch
          %3532 = sbr.rel (%p3530) target = $region68
        $region67: #{tpu_custom_call.1} parent=39 // pred_region
          %v3533 = vld [vmem:[#allocation11] sm:$0xff]
          %v3534 = vld [vmem:[#allocation10] sm:$0x1]
          %v3536 = vlaneseq
          %v3537 = vshrl.u32 %v3536, 7
          %v3538 = vsub.s32 0, %v3537
          %v3539 = vrot.slane %v3534, %v3538
          %v3541 = vadd.f32 %v3533, %v3539
          %3542 = vst [vmem:[#allocation11] sm:$0xff] %v3541
        $region68: #{tpu_custom_call.1} parent=39 // pred_fallthru
          _
        // Predicated region
        $region69: #{tpu_custom_call.1} parent=39 // pred_check
          %p3543 = pneg %p157
        $region70: #{tpu_custom_call.1} parent=39 // pred_check_branch
          %3545 = sbr.rel (%p3543) target = $region72
        $region71: #{tpu_custom_call.1} parent=39 // pred_region
          %s3547 = ssub.s32 128, 128
          %3548 = vsyncadd [#allocation4], %s3547
          %s3550 = sshll.u32 [#allocation11], 4
          %s3551 = int_to_ptr.vmem [resolvable:$true] %s3550
          %3553 = dma.vmem_to_hbm [thread:$0]  %s3551, 128, %s5, [#allocation4]
        $region72: #{tpu_custom_call.1} parent=39 // pred_fallthru
          _
        // Predicated region
        $region73: #{tpu_custom_call.1} parent=39 // pred_check
          %p3554 = pneg %p157
        $region74: #{tpu_custom_call.1} parent=39 // pred_check_branch
          %3556 = sbr.rel (%p3554) target = $region76
        $region75: #{tpu_custom_call.1} parent=39 // pred_region
          %3557 = dma.done [#allocation4], 128
        $region76: #{tpu_custom_call.1} parent=39 // pred_fallthru
          _
      $region40: #{tpu_custom_call.1} parent=5 // pred_fallthru
        _
      %p3558 = scmp.le.s32.totalorder 2, %s19
      // Predicated region
      $region77: #{tpu_custom_call.1} parent=5 // pred_check
        %p3559 = pneg %p3558
      $region78: #{tpu_custom_call.1} parent=5 // pred_check_branch
        %3561 = sbr.rel (%p3559) target = $region80
      $region79: #{tpu_custom_call.1} parent=5 // pred_region
        %s3562 = ssub.s32 %s19, 2
      $region80: #{tpu_custom_call.1} parent=5 // pred_fallthru
        _
    $region6: #{tpu_custom_call.1} parent=1 // loop_footer
      %s23 = sadd.s32 1, %s19
    $region7: #{tpu_custom_call.1} parent=1 // loop_footer_branch
      %18 = sbr.rel target = $region3
    $region8: #{tpu_custom_call.1} parent=1 // loop_exit
      _
    %3563 = vsyncpa [#allocation3], 1
    %s3564 = scalar_lea.sflag [#allocation3], 1
    %3565 = vsyncpa %s3564, 1
    %3566 = vsyncpa [#allocation6], 1
    %s3567 = scalar_lea.sflag [#allocation6], 1
    %3568 = vsyncpa %s3567, 1
    %3569 = vsyncpa [#allocation9], 1
    %s3570 = scalar_lea.sflag [#allocation9], 1
    %3571 = vsyncpa %s3570, 1
    %3572 = vsyncpa [#allocation4], 1
    %s3573 = scalar_lea.sflag [#allocation4], 1
    %3574 = vsyncpa %s3573, 1

</llo_original>
